<compile_context>
chip_gen: v7x
topology: tpu7x:2x2x1
jax: 0.10.0
libtpu: 0.0.40
codegen_flags: <defaults>
</compile_context>

<pallas_src>
import functools
import math

import jax
import jax.numpy as jnp
from jax import lax
from jax.experimental import pallas as pl
from jax.experimental.pallas import tpu as pltpu

LN_EPS = 1e-5    # nn.LayerNorm default
BN_EPS = 1e-5    # nn.BatchNorm1d default
GEN_EPS = 1e-7   # GENConv message eps

LANE = 128
SUBLANE = 8


def _round_up(x, m):
    return (x + m - 1) // m * m


# ----------------------------------------------------------------------------
# Fused Pallas kernel: encoder + L x (LayerNorm/ReLU -> GENConv -> residual) + decoder
# ----------------------------------------------------------------------------
def _fused_genconv_kernel(x_ref, adj_ref, ew_ref, eb_ref, dw_ref, db_ref,
                          lng_ref, lnb_ref, w1_ref, bns_ref, bnt_ref, w2_ref,
                          o_ref, x_vmem, *, d_real, dp):
    l = pl.program_id(0)

    # ---- node encoder (layer 0 only): x_vmem = x @ Wenc + benc --------------
    @pl.when(l == 0)
    def _encode():
        x_vmem[...] = (
            jnp.dot(x_ref[...].astype(jnp.bfloat16), ew_ref[...],
                    preferred_element_type=jnp.float32)
            + eb_ref[...])

    x = x_vmem[...]                                     # [N, DP] f32, padded lanes == 0

    # ---- DeepGCNLayer 'res+' pre-activation: LayerNorm over the D real lanes,
    #      then ReLU.  Padded lanes of x are exactly 0, so the sum is already
    #      over real features; the mask keeps (x - mu) out of padded lanes.
    feat_mask = lax.broadcasted_iota(jnp.int32, (1, dp), 1) < d_real
    mu = jnp.sum(x, axis=-1, keepdims=True) * (1.0 / d_real)
    xc = jnp.where(feat_mask, x - mu, 0.0)
    var = jnp.sum(xc * xc, axis=-1, keepdims=True) * (1.0 / d_real)
    h = xc * lax.rsqrt(var + LN_EPS) * lng_ref[0] + lnb_ref[0]
    h = jnp.maximum(h, 0.0)
    # TODO(synk): convolution_dropout=0.1 is a training-mode op; identity in eval.

    # ---- GENConv (aggr='softmax', t=1): msg_j = relu(h_j) + eps (h >= 0) ----
    msg = h + GEN_EPS                                    # f32
    # Shift by the global per-feature max (the softmax ratio is shift invariant);
    # clamp the exponent at -80 so exp() never underflows to 0, even after the
    # bf16 cast -> denominator strictly positive for every connected node.
    gmax = jnp.max(msg, axis=0, keepdims=True)           # [1, DP]
    e = jnp.exp(jnp.maximum(msg - gmax, -80.0))          # f32, in (exp(-80), 1]
    # One merged aggregation matmul on the MXU: adj @ [e*msg | e], bf16 operands.
    rhs = jnp.concatenate([e * msg, e], axis=-1).astype(jnp.bfloat16)   # [N, 2*DP]
    s = jnp.dot(adj_ref[...], rhs, preferred_element_type=jnp.float32)  # [N, 2*DP]
    numer = s[:, :dp]
    denom = s[:, dp:]
    has_in = denom > 0.0                                 # False only for isolated nodes
    recip = pl.reciprocal(jnp.where(has_in, denom, 1.0), approx=True)
    agg = jnp.where(has_in, numer * recip, 0.0)
    out = agg + h                                        # GENConv: out = aggr + x_dst

    # ---- GENConv MLP: Lin(D,2D, no bias) -> BN(eval, pre-folded) -> ReLU -> Lin(2D,D, no bias)
    z = jnp.dot(out.astype(jnp.bfloat16), w1_ref[0],
                preferred_element_type=jnp.float32)
    z = jnp.maximum(z * bns_ref[0] + bnt_ref[0], 0.0)
    z = jnp.dot(z.astype(jnp.bfloat16), w2_ref[0],
                preferred_element_type=jnp.float32)

    # ---- DeepGCNLayer residual, carried in VMEM to the next grid step -------
    x_vmem[...] = x + z

    # ---- decoder (last layer only); dense_dropout p=0.0 -> identity ---------
    @pl.when(l == pl.num_programs(0) - 1)
    def _decode():
        o_ref[...] = (
            jnp.dot(x_vmem[...].astype(jnp.bfloat16), dw_ref[...],
                    preferred_element_type=jnp.float32)
            + db_ref[...])


# ----------------------------------------------------------------------------
# Host-side packing: pad to lane-dense shapes, stack per-layer weights, fold BN
# ----------------------------------------------------------------------------
def pack_params(params, DP, DHP, FINP, FOUTP):
    pad2 = lambda a, r, c: jnp.pad(a, ((0, r - a.shape[0]), (0, c - a.shape[1])))
    padv = lambda v, c, cv=0.0: jnp.pad(v, (0, c - v.shape[0]), constant_values=cv)

    ln_g, ln_b, w1, bn_s, bn_t, w2 = [], [], [], [], [], []
    for p in params["layers"]:
        ln_g.append(padv(p["ln_g"], DP))           # pad value irrelevant (masked)
        ln_b.append(padv(p["ln_b"], DP))           # pad 0 -> padded lanes stay 0
        w1.append(pad2(p["w1"], DP, DHP))          # zero rows/cols -> no leakage
        s = p["bn_g"] / jnp.sqrt(p["bn_v"] + BN_EPS)   # fold eval-mode BatchNorm
        t = p["bn_b"] - p["bn_m"] * s
        bn_s.append(padv(s, DHP, 1.0))
        bn_t.append(padv(t, DHP))
        w2.append(pad2(p["w2"], DHP, DP))

    stack_vec = lambda xs: jnp.stack(xs)[:, None, :]     # [L, 1, C]
    return dict(
        enc_w=pad2(params["enc_w"], FINP, DP).astype(jnp.bfloat16),
        enc_b=padv(params["enc_b"], DP)[None, :],
        dec_w=pad2(params["dec_w"], DP, FOUTP).astype(jnp.bfloat16),
        dec_b=padv(params["dec_b"], FOUTP)[None, :],
        ln_g=stack_vec(ln_g), ln_b=stack_vec(ln_b),
        w1=jnp.stack(w1).astype(jnp.bfloat16),
        bn_s=stack_vec(bn_s), bn_t=stack_vec(bn_t),
        w2=jnp.stack(w2).astype(jnp.bfloat16),
    )


def forward(x, adj, params):
    """Run the fused DeepRNAGenConv forward pass on TPU via Pallas."""
    n, f_in = x.shape
    d = params["enc_w"].shape[1]
    dh = params["layers"][0]["w1"].shape[1]
    f_out = params["dec_w"].shape[1]
    num_layers = len(params["layers"])

    DP, DHP = _round_up(d, LANE), _round_up(dh, LANE)
    FINP, FOUTP = _round_up(f_in, LANE), _round_up(f_out, LANE)
    NP = _round_up(n, SUBLANE)

    pk = pack_params(params, DP, DHP, FINP, FOUTP)
    x_p = jnp.zeros((NP, FINP), jnp.float32).at[:n, :f_in].set(x)
    adj_p = jnp.zeros((NP, NP), jnp.float32).at[:n, :n].set(adj).astype(jnp.bfloat16)

    kern = functools.partial(_fused_genconv_kernel, d_real=d, dp=DP)

    whole = lambda shape: pl.BlockSpec(shape, lambda l: (0, 0))          # resident
    per_layer = lambda shape: pl.BlockSpec((1,) + shape, lambda l: (l, 0, 0))

    out = pl.pallas_call(
        kern,
        out_shape=jax.ShapeDtypeStruct((NP, FOUTP), jnp.float32),
        grid=(num_layers,),
        in_specs=[
            whole((NP, FINP)),                       # x         (fetched once)
            whole((NP, NP)),                         # adj       (VMEM-resident)
            whole((FINP, DP)), whole((1, DP)),       # encoder W, b
            whole((DP, FOUTP)), whole((1, FOUTP)),   # decoder W, b
            per_layer((1, DP)), per_layer((1, DP)),  # LayerNorm gamma / beta
            per_layer((DP, DHP)),                    # MLP W1 (bf16)
            per_layer((1, DHP)), per_layer((1, DHP)),# folded BN scale / shift
            per_layer((DHP, DP)),                    # MLP W2 (bf16)
        ],
        out_specs=whole((NP, FOUTP)),
        scratch_shapes=[pltpu.VMEM((NP, DP), jnp.float32)],   # carried hidden state
        compiler_params=pltpu.CompilerParams(
            dimension_semantics=("arbitrary",),      # layer axis carries state
            vmem_limit_bytes=48 * 1024 * 1024),
    )(x_p, adj_p,
      pk["enc_w"], pk["enc_b"], pk["dec_w"], pk["dec_b"],
      pk["ln_g"], pk["ln_b"], pk["w1"], pk["bn_s"], pk["bn_t"], pk["w2"])

    return out[:n, :f_out]


# ----------------------------------------------------------------------------
# Pure-JAX references
#   1) f32, faithful PyTorch semantics (independent per-edge softmax formulation)
#   2) precision-matched (same bf16 matmul-operand casts / folded BN as the kernel)
# ----------------------------------------------------------------------------
def _ref_layer_f32(x, adj, p):
    mu = x.mean(-1, keepdims=True)
    var = ((x - mu) ** 2).mean(-1, keepdims=True)
    h = (x - mu) / jnp.sqrt(var + LN_EPS) * p["ln_g"] + p["ln_b"]
    h = jax.nn.relu(h)
    msg = jax.nn.relu(h) + GEN_EPS                         # [N, D]
    mask = adj[:, :, None] > 0                             # [N, N, 1]
    logits = jnp.where(mask, msg[None, :, :], -jnp.inf)
    alpha = jax.nn.softmax(logits, axis=1)
    alpha = jnp.where(jnp.isnan(alpha), 0.0, alpha)        # isolated nodes -> 0
    agg = jnp.sum(alpha * msg[None, :, :], axis=1)
    out = agg + h
    z = out @ p["w1"]
    z = (z - p["bn_m"]) / jnp.sqrt(p["bn_v"] + BN_EPS) * p["bn_g"] + p["bn_b"]
    z = jax.nn.relu(z)
    z = z @ p["w2"]
    return x + z


def ref_forward_f32(x, adj, params):
    h = x @ params["enc_w"] + params["enc_b"]
    for p in params["layers"]:
        h = _ref_layer_f32(h, adj, p)
    return h @ params["dec_w"] + params["dec_b"]


def _bf16_dot(a, b):
    return jnp.dot(a.astype(jnp.bfloat16), b.astype(jnp.bfloat16),
                   preferred_element_type=jnp.float32)


def _ref_layer_matched(x, adj, p):
    d = x.shape[-1]
    mu = x.mean(-1, keepdims=True)
    xc = x - mu
    var = (xc * xc).mean(-1, keepdims=True)
    h = jax.nn.relu(xc * lax.rsqrt(var + LN_EPS) * p["ln_g"] + p["ln_b"])
    msg = h + GEN_EPS
    gmax = msg.max(0, keepdims=True)
    e = jnp.exp(jnp.maximum(msg - gmax, -80.0))
    rhs = jnp.concatenate([e * msg, e], axis=-1).astype(jnp.bfloat16)
    s = jnp.dot(adj.astype(jnp.bfloat16), rhs, preferred_element_type=jnp.float32)
    numer, denom = s[:, :d], s[:, d:]
    agg = jnp.where(denom > 0, numer / jnp.where(denom > 0, denom, 1.0), 0.0)
    out = agg + h
    bs = p["bn_g"] / jnp.sqrt(p["bn_v"] + BN_EPS)
    bt = p["bn_b"] - p["bn_m"] * bs
    z = jax.nn.relu(_bf16_dot(out, p["w1"]) * bs + bt)
    z = _bf16_dot(z, p["w2"])
    return x + z


def ref_forward_matched(x, adj, params):
    h = _bf16_dot(x, params["enc_w"]) + params["enc_b"]
    for p in params["layers"]:
        h = _ref_layer_matched(h, adj, p)
    return _bf16_dot(h, params["dec_w"]) + params["dec_b"]


# ----------------------------------------------------------------------------
# Deterministic parameter init (matching module __init__ shapes / defaults)
# ----------------------------------------------------------------------------
def _lin_init(key, fan_in, fan_out, bias=True):
    kw, kb = jax.random.split(key)
    bound = 1.0 / math.sqrt(fan_in)
    w = jax.random.uniform(kw, (fan_in, fan_out), jnp.float32, -bound, bound)
    b = (jax.random.uniform(kb, (fan_out,), jnp.float32, -bound, bound)
         if bias else None)
    return w, b


def init_params(key, f_in, d, num_layers, f_out):
    keys = jax.random.split(key, 2 + 2 * num_layers)
    enc_w, enc_b = _lin_init(keys[0], f_in, d)
    dec_w, dec_b = _lin_init(keys[1], d, f_out)
    layers = []
    dh = 2 * d  # GENConv MLP expansion=2
    for li in range(num_layers):
        w1, _ = _lin_init(keys[2 + 2 * li], d, dh, bias=False)
        w2, _ = _lin_init(keys[3 + 2 * li], dh, d, bias=False)
        layers.append(dict(
            ln_g=jnp.ones((d,), jnp.float32),   # nn.LayerNorm default init
            ln_b=jnp.zeros((d,), jnp.float32),
            w1=w1,
            bn_g=jnp.ones((dh,), jnp.float32),  # BatchNorm1d default init / running stats
            bn_b=jnp.zeros((dh,), jnp.float32),
            bn_m=jnp.zeros((dh,), jnp.float32),
            bn_v=jnp.ones((dh,), jnp.float32),
            w2=w2,
        ))
    return dict(enc_w=enc_w, enc_b=enc_b, dec_w=dec_w, dec_b=dec_b, layers=layers)


# ----------------------------------------------------------------------------
if __name__ == "__main__":
    N, F_IN, D, NUM_LAYERS, F_OUT = 16, 8, 32, 2, 4

    key = jax.random.PRNGKey(0)
    k_x, k_p = jax.random.split(key)
    x = jax.random.normal(k_x, (N, F_IN), jnp.float32)

    # bidirectional chain graph (consecutive RNA bases): edge_index [2, E]
    src = jnp.concatenate([jnp.arange(N - 1), jnp.arange(1, N)])
    dst = jnp.concatenate([jnp.arange(1, N), jnp.arange(N - 1)])
    edge_index = jnp.stack([src, dst]).astype(jnp.int32)            # [2, 30]
    adj = jnp.zeros((N, N), jnp.float32).at[edge_index[1], edge_index[0]].set(1.0)

    params = init_params(k_p, F_IN, D, NUM_LAYERS, F_OUT)

    out = forward(x, adj, params)
    out = jax.block_until_ready(out)
    assert out.shape == (N, F_OUT), out.shape

    # Tight check vs a plain-JAX mirror of the kernel math (same bf16 casts).
    ref_m = ref_forward_matched(x, adj, params)
    assert jnp.allclose(out, ref_m, atol=3e-2, rtol=3e-2), (
        "matched-precision mismatch", float(jnp.max(jnp.abs(out - ref_m))))

    # Loose semantic check vs the faithful f32 PyTorch-semantics reference
    # (tolerance covers the bf16 matmuls + approximate reciprocal).
    ref = ref_forward_f32(x, adj, params)
    assert jnp.allclose(out, ref, atol=1e-1, rtol=1e-1), (
        "f32 semantic mismatch", float(jnp.max(jnp.abs(out - ref))))

    print("KERNEL_OK")
</pallas_src>

<mosaic_0001>
module attributes {stable_mosaic.version = 11 : i64} {
  func.func @_fused_genconv_kernel(%arg0: i32, %arg1: memref<16x128xf32, #tpu.memory_space<vmem>>, %arg2: memref<16x16xbf16, #tpu.memory_space<vmem>>, %arg3: memref<128x128xbf16, #tpu.memory_space<vmem>>, %arg4: memref<1x128xf32, #tpu.memory_space<vmem>>, %arg5: memref<128x128xbf16, #tpu.memory_space<vmem>>, %arg6: memref<1x128xf32, #tpu.memory_space<vmem>>, %arg7: memref<1x1x128xf32, #tpu.memory_space<vmem>>, %arg8: memref<1x1x128xf32, #tpu.memory_space<vmem>>, %arg9: memref<1x128x128xbf16, #tpu.memory_space<vmem>>, %arg10: memref<1x1x128xf32, #tpu.memory_space<vmem>>, %arg11: memref<1x1x128xf32, #tpu.memory_space<vmem>>, %arg12: memref<1x128x128xbf16, #tpu.memory_space<vmem>>, %arg13: memref<16x128xf32, #tpu.memory_space<vmem>>, %arg14: memref<16x128xf32, #tpu.memory_space<vmem>>) attributes {dimension_semantics = [#tpu.dimension_semantics<arbitrary>], iteration_bounds = array<i64: 2>, scalar_prefetch = 0 : i64, scratch_operands = 1 : i64, tpu.core_type = #tpu.core_type<tc>, window_params = [{pipeline_mode = #tpu.pipeline_mode<synchronous>, transform_indices = @transform_0, window_bounds = array<i64: 16, 128>}, {pipeline_mode = #tpu.pipeline_mode<synchronous>, transform_indices = @transform_1, window_bounds = array<i64: 16, 16>}, {pipeline_mode = #tpu.pipeline_mode<synchronous>, transform_indices = @transform_2, window_bounds = array<i64: 128, 128>}, {pipeline_mode = #tpu.pipeline_mode<synchronous>, transform_indices = @transform_3, window_bounds = array<i64: 1, 128>}, {pipeline_mode = #tpu.pipeline_mode<synchronous>, transform_indices = @transform_4, window_bounds = array<i64: 128, 128>}, {pipeline_mode = #tpu.pipeline_mode<synchronous>, transform_indices = @transform_5, window_bounds = array<i64: 1, 128>}, {transform_indices = @transform_6, window_bounds = array<i64: 1, 1, 128>}, {transform_indices = @transform_7, window_bounds = array<i64: 1, 1, 128>}, {transform_indices = @transform_8, window_bounds = array<i64: 1, 128, 128>}, {transform_indices = @transform_9, window_bounds = array<i64: 1, 1, 128>}, {transform_indices = @transform_10, window_bounds = array<i64: 1, 1, 128>}, {transform_indices = @transform_11, window_bounds = array<i64: 1, 128, 128>}, {pipeline_mode = #tpu.pipeline_mode<synchronous>, transform_indices = @transform_12, window_bounds = array<i64: 16, 128>}]} {
    %c0_i32 = arith.constant 0 : i32
    %0 = arith.cmpi eq, %arg0, %c0_i32 : i32
    %1 = arith.extui %0 : i1 to i32
    %c0_i32_0 = arith.constant 0 : i32
    %2 = arith.cmpi ne, %1, %c0_i32_0 : i32
    scf.if %2 {
      %c0_41 = arith.constant 0 : index
      %c0_42 = arith.constant 0 : index
      %85 = vector.load %arg1[%c0_41, %c0_42] : memref<16x128xf32, #tpu.memory_space<vmem>>, vector<16x128xf32>
      %86 = arith.truncf %85 : vector<16x128xf32> to vector<16x128xbf16>
      %c0_43 = arith.constant 0 : index
      %c0_44 = arith.constant 0 : index
      %87 = vector.load %arg3[%c0_43, %c0_44] : memref<128x128xbf16, #tpu.memory_space<vmem>>, vector<128x128xbf16>
      %cst_45 = arith.constant dense<0.000000e+00> : vector<16x128xf32>
      %88 = tpu.matmul %86, %87, %cst_45 {dimension_numbers = #tpu.dot_dimension_numbers<[1], [0], [0], [1], [0, 0, 1, 1], [], []>} : vector<16x128xbf16>, vector<128x128xbf16>, vector<16x128xf32> -> vector<16x128xf32>
      %c0_46 = arith.constant 0 : index
      %c0_47 = arith.constant 0 : index
      %89 = vector.load %arg4[%c0_46, %c0_47] : memref<1x128xf32, #tpu.memory_space<vmem>>, vector<1x128xf32>
      %90 = vector.broadcast %89 : vector<1x128xf32> to vector<16x128xf32>
      %91 = arith.addf %88, %90 : vector<16x128xf32>
      %c0_48 = arith.constant 0 : index
      %c0_49 = arith.constant 0 : index
      %92 = vector.load %arg14[%c0_48, %c0_49] : memref<16x128xf32, #tpu.memory_space<vmem>>, vector<16x128xf32>
      tpu.vector_store %arg14[%c0_48, %c0_49], %91 {strides = array<i32>} : memref<16x128xf32, #tpu.memory_space<vmem>>, vector<16x128xf32>,
    } else {
    }
    %c0 = arith.constant 0 : index
    %c0_1 = arith.constant 0 : index
    %3 = vector.load %arg14[%c0, %c0_1] : memref<16x128xf32, #tpu.memory_space<vmem>>, vector<16x128xf32>
    %4 = tpu.iota {dimensions = array<i32: 1>} : vector<1x128xi32>
    %c32_i32 = arith.constant 32 : i32
    %5 = vector.broadcast %c32_i32 : i32 to vector<1x128xi32>
    %6 = arith.cmpi slt, %4, %5 : vector<1x128xi32>
    %cst = arith.constant dense<0.000000e+00> : vector<16xf32>
    %7 = vector.multi_reduction <add>, %3, %cst [1] : vector<16x128xf32> to vector<16xf32>
    %8 = vector.shape_cast %7 : vector<16xf32> to vector<16x1xf32>
    %cst_2 = arith.constant 3.125000e-02 : f32
    %9 = vector.broadcast %cst_2 : f32 to vector<16x1xf32>
    %10 = arith.mulf %8, %9 : vector<16x1xf32>
    %11 = vector.broadcast %10 : vector<16x1xf32> to vector<16x128xf32>
    %12 = arith.subf %3, %11 : vector<16x128xf32>
    %cst_3 = arith.constant 0.000000e+00 : f32
    %13 = vector.shape_cast %6 : vector<1x128xi1> to vector<1x128xi1>
    %14 = vector.broadcast %13 : vector<1x128xi1> to vector<16x128xi1>
    %15 = vector.broadcast %cst_3 : f32 to vector<16x128xf32>
    %16 = arith.select %14, %12, %15 : vector<16x128xi1>, vector<16x128xf32>
    %17 = arith.mulf %16, %16 : vector<16x128xf32>
    %cst_4 = arith.constant dense<0.000000e+00> : vector<16xf32>
    %18 = vector.multi_reduction <add>, %17, %cst_4 [1] : vector<16x128xf32> to vector<16xf32>
    %19 = vector.shape_cast %18 : vector<16xf32> to vector<16x1xf32>
    %cst_5 = arith.constant 3.125000e-02 : f32
    %20 = vector.broadcast %cst_5 : f32 to vector<16x1xf32>
    %21 = arith.mulf %19, %20 : vector<16x1xf32>
    %cst_6 = arith.constant 9.99999974E-6 : f32
    %22 = vector.broadcast %cst_6 : f32 to vector<16x1xf32>
    %23 = arith.addf %21, %22 : vector<16x1xf32>
    %24 = math.rsqrt %23 : vector<16x1xf32>
    %25 = vector.broadcast %24 : vector<16x1xf32> to vector<16x128xf32>
    %26 = arith.mulf %16, %25 : vector<16x128xf32>
    %c0_7 = arith.constant 0 : index
    %c0_8 = arith.constant 0 : index
    %c0_9 = arith.constant 0 : index
    %27 = vector.load %arg7[%c0_7, %c0_8, %c0_9] : memref<1x1x128xf32, #tpu.memory_space<vmem>>, vector<1x1x128xf32>
    %28 = vector.shape_cast %27 : vector<1x1x128xf32> to vector<1x128xf32>
    %29 = vector.broadcast %28 : vector<1x128xf32> to vector<16x128xf32>
    %30 = arith.mulf %26, %29 : vector<16x128xf32>
    %c0_10 = arith.constant 0 : index
    %c0_11 = arith.constant 0 : index
    %c0_12 = arith.constant 0 : index
    %31 = vector.load %arg8[%c0_10, %c0_11, %c0_12] : memref<1x1x128xf32, #tpu.memory_space<vmem>>, vector<1x1x128xf32>
    %32 = vector.shape_cast %31 : vector<1x1x128xf32> to vector<1x128xf32>
    %33 = vector.broadcast %32 : vector<1x128xf32> to vector<16x128xf32>
    %34 = arith.addf %30, %33 : vector<16x128xf32>
    %cst_13 = arith.constant 0.000000e+00 : f32
    %35 = vector.broadcast %cst_13 : f32 to vector<16x128xf32>
    %36 = arith.maximumf %34, %35 : vector<16x128xf32>
    %cst_14 = arith.constant 1.000000e-07 : f32
    %37 = vector.broadcast %cst_14 : f32 to vector<16x128xf32>
    %38 = arith.addf %36, %37 : vector<16x128xf32>
    %cst_15 = arith.constant dense<0xFF800000> : vector<128xf32>
    %39 = vector.multi_reduction <maximumf>, %38, %cst_15 [0] : vector<16x128xf32> to vector<128xf32>
    %40 = vector.shape_cast %39 : vector<128xf32> to vector<1x128xf32>
    %41 = vector.broadcast %40 : vector<1x128xf32> to vector<16x128xf32>
    %42 = arith.subf %38, %41 : vector<16x128xf32>
    %cst_16 = arith.constant -8.000000e+01 : f32
    %43 = vector.broadcast %cst_16 : f32 to vector<16x128xf32>
    %44 = arith.maximumf %42, %43 : vector<16x128xf32>
    %45 = math.exp %44 : vector<16x128xf32>
    %46 = arith.mulf %45, %38 : vector<16x128xf32>
    %47 = tpu.concatenate %46, %45 in 1 : vector<16x128xf32>, vector<16x128xf32> -> vector<16x256xf32>
    %48 = arith.truncf %47 : vector<16x256xf32> to vector<16x256xbf16>
    %c0_17 = arith.constant 0 : index
    %c0_18 = arith.constant 0 : index
    %49 = vector.load %arg2[%c0_17, %c0_18] : memref<16x16xbf16, #tpu.memory_space<vmem>>, vector<16x16xbf16>
    %cst_19 = arith.constant dense<0.000000e+00> : vector<16x256xf32>
    %50 = tpu.matmul %49, %48, %cst_19 {dimension_numbers = #tpu.dot_dimension_numbers<[1], [0], [0], [1], [0, 0, 1, 1], [], []>} : vector<16x16xbf16>, vector<16x256xbf16>, vector<16x256xf32> -> vector<16x256xf32>
    %51 = vector.extract_strided_slice %50 {offsets = [0, 0], sizes = [16, 128], strides = [1, 1]} : vector<16x256xf32> to vector<16x128xf32>
    %52 = vector.extract_strided_slice %50 {offsets = [0, 128], sizes = [16, 128], strides = [1, 1]} : vector<16x256xf32> to vector<16x128xf32>
    %cst_20 = arith.constant 0.000000e+00 : f32
    %53 = vector.broadcast %cst_20 : f32 to vector<16x128xf32>
    %54 = arith.cmpf ogt, %52, %53 : vector<16x128xf32>
    %cst_21 = arith.constant 1.000000e+00 : f32
    %55 = vector.broadcast %cst_21 : f32 to vector<16x128xf32>
    %56 = arith.select %54, %52, %55 : vector<16x128xi1>, vector<16x128xf32>
    %57 = tpu.reciprocal %56 {approx = true} : vector<16x128xf32> -> vector<16x128xf32>
    %58 = arith.mulf %51, %57 : vector<16x128xf32>
    %cst_22 = arith.constant 0.000000e+00 : f32
    %59 = vector.broadcast %cst_22 : f32 to vector<16x128xf32>
    %60 = arith.select %54, %58, %59 : vector<16x128xi1>, vector<16x128xf32>
    %61 = arith.addf %60, %36 : vector<16x128xf32>
    %62 = arith.truncf %61 : vector<16x128xf32> to vector<16x128xbf16>
    %c0_23 = arith.constant 0 : index
    %c0_24 = arith.constant 0 : index
    %c0_25 = arith.constant 0 : index
    %63 = vector.load %arg9[%c0_23, %c0_24, %c0_25] : memref<1x128x128xbf16, #tpu.memory_space<vmem>>, vector<1x128x128xbf16>
    %64 = vector.shape_cast %63 : vector<1x128x128xbf16> to vector<128x128xbf16>
    %cst_26 = arith.constant dense<0.000000e+00> : vector<16x128xf32>
    %65 = tpu.matmul %62, %64, %cst_26 {dimension_numbers = #tpu.dot_dimension_numbers<[1], [0], [0], [1], [0, 0, 1, 1], [], []>} : vector<16x128xbf16>, vector<128x128xbf16>, vector<16x128xf32> -> vector<16x128xf32>
    %c0_27 = arith.constant 0 : index
    %c0_28 = arith.constant 0 : index
    %c0_29 = arith.constant 0 : index
    %66 = vector.load %arg10[%c0_27, %c0_28, %c0_29] : memref<1x1x128xf32, #tpu.memory_space<vmem>>, vector<1x1x128xf32>
    %67 = vector.shape_cast %66 : vector<1x1x128xf32> to vector<1x128xf32>
    %68 = vector.broadcast %67 : vector<1x128xf32> to vector<16x128xf32>
    %69 = arith.mulf %65, %68 : vector<16x128xf32>
    %c0_30 = arith.constant 0 : index
    %c0_31 = arith.constant 0 : index
    %c0_32 = arith.constant 0 : index
    %70 = vector.load %arg11[%c0_30, %c0_31, %c0_32] : memref<1x1x128xf32, #tpu.memory_space<vmem>>, vector<1x1x128xf32>
    %71 = vector.shape_cast %70 : vector<1x1x128xf32> to vector<1x128xf32>
    %72 = vector.broadcast %71 : vector<1x128xf32> to vector<16x128xf32>
    %73 = arith.addf %69, %72 : vector<16x128xf32>
    %cst_33 = arith.constant 0.000000e+00 : f32
    %74 = vector.broadcast %cst_33 : f32 to vector<16x128xf32>
    %75 = arith.maximumf %73, %74 : vector<16x128xf32>
    %76 = arith.truncf %75 : vector<16x128xf32> to vector<16x128xbf16>
    %c0_34 = arith.constant 0 : index
    %c0_35 = arith.constant 0 : index
    %c0_36 = arith.constant 0 : index
    %77 = vector.load %arg12[%c0_34, %c0_35, %c0_36] : memref<1x128x128xbf16, #tpu.memory_space<vmem>>, vector<1x128x128xbf16>
    %78 = vector.shape_cast %77 : vector<1x128x128xbf16> to vector<128x128xbf16>
    %cst_37 = arith.constant dense<0.000000e+00> : vector<16x128xf32>
    %79 = tpu.matmul %76, %78, %cst_37 {dimension_numbers = #tpu.dot_dimension_numbers<[1], [0], [0], [1], [0, 0, 1, 1], [], []>} : vector<16x128xbf16>, vector<128x128xbf16>, vector<16x128xf32> -> vector<16x128xf32>
    %80 = arith.addf %3, %79 : vector<16x128xf32>
    %c0_38 = arith.constant 0 : index
    %c0_39 = arith.constant 0 : index
    %81 = vector.load %arg14[%c0_38, %c0_39] : memref<16x128xf32, #tpu.memory_space<vmem>>, vector<16x128xf32>
    tpu.vector_store %arg14[%c0_38, %c0_39], %80 {strides = array<i32>} : memref<16x128xf32, #tpu.memory_space<vmem>>, vector<16x128xf32>,
    %c1_i32 = arith.constant 1 : i32
    %82 = arith.cmpi eq, %arg0, %c1_i32 : i32
    %83 = arith.extui %82 : i1 to i32
    %c0_i32_40 = arith.constant 0 : i32
    %84 = arith.cmpi ne, %83, %c0_i32_40 : i32
    scf.if %84 {
      %c0_41 = arith.constant 0 : index
      %c0_42 = arith.constant 0 : index
      %85 = vector.load %arg14[%c0_41, %c0_42] : memref<16x128xf32, #tpu.memory_space<vmem>>, vector<16x128xf32>
      %86 = arith.truncf %85 : vector<16x128xf32> to vector<16x128xbf16>
      %c0_43 = arith.constant 0 : index
      %c0_44 = arith.constant 0 : index
      %87 = vector.load %arg5[%c0_43, %c0_44] : memref<128x128xbf16, #tpu.memory_space<vmem>>, vector<128x128xbf16>
      %cst_45 = arith.constant dense<0.000000e+00> : vector<16x128xf32>
      %88 = tpu.matmul %86, %87, %cst_45 {dimension_numbers = #tpu.dot_dimension_numbers<[1], [0], [0], [1], [0, 0, 1, 1], [], []>} : vector<16x128xbf16>, vector<128x128xbf16>, vector<16x128xf32> -> vector<16x128xf32>
      %c0_46 = arith.constant 0 : index
      %c0_47 = arith.constant 0 : index
      %89 = vector.load %arg6[%c0_46, %c0_47] : memref<1x128xf32, #tpu.memory_space<vmem>>, vector<1x128xf32>
      %90 = vector.broadcast %89 : vector<1x128xf32> to vector<16x128xf32>
      %91 = arith.addf %88, %90 : vector<16x128xf32>
      %c0_48 = arith.constant 0 : index
      %c0_49 = arith.constant 0 : index
      %92 = vector.load %arg13[%c0_48, %c0_49] : memref<16x128xf32, #tpu.memory_space<vmem>>, vector<16x128xf32>
      tpu.vector_store %arg13[%c0_48, %c0_49], %91 {strides = array<i32>} : memref<16x128xf32, #tpu.memory_space<vmem>>, vector<16x128xf32>,
    } else {
    }
    return
  }
  func.func @transform_0(%arg0: i32) -> (i32, i32) {
    %c0_i32 = arith.constant 0 : i32
    %c0_i32_0 = arith.constant 0 : i32
    %c0_i32_1 = arith.constant 0 : i32
    return %c0_i32, %c0_i32_0 : i32, i32
  }
  func.func @transform_1(%arg0: i32) -> (i32, i32) {
    %c0_i32 = arith.constant 0 : i32
    %c0_i32_0 = arith.constant 0 : i32
    %c0_i32_1 = arith.constant 0 : i32
    return %c0_i32, %c0_i32_0 : i32, i32
  }
  func.func @transform_2(%arg0: i32) -> (i32, i32) {
    %c0_i32 = arith.constant 0 : i32
    %c0_i32_0 = arith.constant 0 : i32
    %c0_i32_1 = arith.constant 0 : i32
    return %c0_i32, %c0_i32_0 : i32, i32
  }
  func.func @transform_3(%arg0: i32) -> (i32, i32) {
    %c0_i32 = arith.constant 0 : i32
    %c0_i32_0 = arith.constant 0 : i32
    %c0_i32_1 = arith.constant 0 : i32
    return %c0_i32, %c0_i32_0 : i32, i32
  }
  func.func @transform_4(%arg0: i32) -> (i32, i32) {
    %c0_i32 = arith.constant 0 : i32
    %c0_i32_0 = arith.constant 0 : i32
    %c0_i32_1 = arith.constant 0 : i32
    return %c0_i32, %c0_i32_0 : i32, i32
  }
  func.func @transform_5(%arg0: i32) -> (i32, i32) {
    %c0_i32 = arith.constant 0 : i32
    %c0_i32_0 = arith.constant 0 : i32
    %c0_i32_1 = arith.constant 0 : i32
    return %c0_i32, %c0_i32_0 : i32, i32
  }
  func.func @transform_6(%arg0: i32) -> (i32, i32, i32) {
    %c0_i32 = arith.constant 0 : i32
    %c0_i32_0 = arith.constant 0 : i32
    %c0_i32_1 = arith.constant 0 : i32
    return %arg0, %c0_i32, %c0_i32_0 : i32, i32, i32
  }
  func.func @transform_7(%arg0: i32) -> (i32, i32, i32) {
    %c0_i32 = arith.constant 0 : i32
    %c0_i32_0 = arith.constant 0 : i32
    %c0_i32_1 = arith.constant 0 : i32
    return %arg0, %c0_i32, %c0_i32_0 : i32, i32, i32
  }
  func.func @transform_8(%arg0: i32) -> (i32, i32, i32) {
    %c0_i32 = arith.constant 0 : i32
    %c0_i32_0 = arith.constant 0 : i32
    %c0_i32_1 = arith.constant 0 : i32
    return %arg0, %c0_i32, %c0_i32_0 : i32, i32, i32
  }
  func.func @transform_9(%arg0: i32) -> (i32, i32, i32) {
    %c0_i32 = arith.constant 0 : i32
    %c0_i32_0 = arith.constant 0 : i32
    %c0_i32_1 = arith.constant 0 : i32
    return %arg0, %c0_i32, %c0_i32_0 : i32, i32, i32
  }
  func.func @transform_10(%arg0: i32) -> (i32, i32, i32) {
    %c0_i32 = arith.constant 0 : i32
    %c0_i32_0 = arith.constant 0 : i32
    %c0_i32_1 = arith.constant 0 : i32
    return %arg0, %c0_i32, %c0_i32_0 : i32, i32, i32
  }
  func.func @transform_11(%arg0: i32) -> (i32, i32, i32) {
    %c0_i32 = arith.constant 0 : i32
    %c0_i32_0 = arith.constant 0 : i32
    %c0_i32_1 = arith.constant 0 : i32
    return %arg0, %c0_i32, %c0_i32_0 : i32, i32, i32
  }
  func.func @transform_12(%arg0: i32) -> (i32, i32) {
    %c0_i32 = arith.constant 0 : i32
    %c0_i32_0 = arith.constant 0 : i32
    %c0_i32_1 = arith.constant 0 : i32
    return %c0_i32, %c0_i32_0 : i32, i32
  }
}

</mosaic_0001>

<llo_original>
// kernel: tpu_custom_call.1
$region0: #{tpu_custom_call.1}
  #allocation0 [shape = 'u32[]', space=smem, size = 0x4, offset = 0x4, fixed_abs, tag = 'smem constant byte address 0x4 - core index']
  #allocation1 [shape = 'u32[144,128]{1,0:T(1,128)}', space=vmem, size = 0x12000, scoped, tag = 'internal scratch']
  #allocation2 [shape = 'f32[16,128]{1,0:T(8,128)}', space=vmem, size = 0x2000, scoped, tag = 'scratch operand']
  %s0 = inlined_call_operand.hbm [shape: f32[16,128], index: 0, kind: input, shape index: {}]
  %s1 = inlined_call_operand.hbm [shape: bf16[16,16], index: 1, kind: input, shape index: {}]
  %s2 = inlined_call_operand.hbm [shape: bf16[128,128], index: 2, kind: input, shape index: {}]
  %s3 = inlined_call_operand.vmem [shape: f32[1,128], index: 3, kind: input, shape index: {}]
  %s4 = inlined_call_operand.hbm [shape: bf16[128,128], index: 4, kind: input, shape index: {}]
  %s5 = inlined_call_operand.vmem [shape: f32[1,128], index: 5, kind: input, shape index: {}]
  %s6 = inlined_call_operand.vmem [shape: f32[2,1,128], index: 6, kind: input, shape index: {}]
  %s7 = inlined_call_operand.vmem [shape: f32[2,1,128], index: 7, kind: input, shape index: {}]
  %s8 = inlined_call_operand.hbm [shape: bf16[2,128,128], index: 8, kind: input, shape index: {}]
  %s9 = inlined_call_operand.vmem [shape: f32[2,1,128], index: 9, kind: input, shape index: {}]
  %s10 = inlined_call_operand.vmem [shape: f32[2,1,128], index: 10, kind: input, shape index: {}]
  %s11 = inlined_call_operand.hbm [shape: bf16[2,128,128], index: 11, kind: input, shape index: {}]
  %s12 = inlined_call_operand.hbm [shape: f32[16,128], index: 12, kind: output, shape index: {}]
  %s13 = sld [smem:[#allocation0]]
  $region113: #{tpu_custom_call.1} parent=0
    _
  %s15 = ssub.s32 1, %s13
  %s16 = scalar_select 0, %s15, %s13
  $region1: #{tpu_custom_call.1} parent=0
    #allocation3 [shape = 'u8[8192]{0}', space=vmem, size = 0x2000, scoped, tag = 'input window, operand 0, single buffered']
    #allocation4 [shape = 's32[2]{0}', space=sflag, size = 0x8, scoped, tag = 'scoped memory for tpu_custom_call.1']
    #allocation5 [shape = 's32[2]{0}', space=sflag, size = 0x8, scoped, tag = 'scoped memory for tpu_custom_call.1']
    #allocation6 [shape = 'u8[4096]{0}', space=vmem, size = 0x1000, scoped, tag = 'input window, operand 1, single buffered']
    #allocation7 [shape = 's32[1]{0}', space=sflag, size = 0x4, scoped, tag = 'scoped memory for tpu_custom_call.1']
    #allocation8 [shape = 'u8[32768]{0}', space=vmem, size = 0x8000, scoped, tag = 'input window, operand 2, single buffered']
    #allocation9 [shape = 'u8[32768]{0}', space=vmem, size = 0x8000, scoped, tag = 'input window, operand 4, single buffered']
    #allocation10 [shape = 's32[1]{0}', space=sflag, size = 0x4, scoped, tag = 'scoped memory for tpu_custom_call.1']
    #allocation11 [shape = 'u8[65536]{0}', space=vmem, size = 0x10000, scoped, tag = 'input window, operand 8']
    #allocation12 [shape = 'u8[65536]{0}', space=vmem, size = 0x10000, scoped, tag = 'input window, operand 11']
    #allocation13 [shape = 'u8[8192]{0}', space=vmem, size = 0x2000, scoped, tag = 'output window, operand 0, single buffered']
    %17 = vsyncpa [#allocation4], 0
    %18 = vsyncpa [#allocation7], 0
    %19 = vsyncpa [#allocation10], 0
    %20 = vsyncpa [#allocation5], 0
    loop: start=0, step=1, limit=4
    $region2: #{tpu_custom_call.1} parent=1 // loop_pre_header
      _
    $region3: #{tpu_custom_call.1} parent=1 // loop_header
      %s22 = sphi 0, %s26
      %p23 = scmp.ge.s32.totalorder %s22, 4
      %s30 = sphi 0, %s30
      %s32 = sphi 0, %s30
      %s33 = sphi 0, %s32
      %s47 = sphi 0, %s33
      %s51 = sphi 0, %s51
      %s53 = sphi 0, %s51
      %s54 = sphi 0, %s53
      %s68 = sphi 0, %s54
      %s72 = sphi 0, %s72
      %s74 = sphi 0, %s72
      %s75 = sphi 0, %s74
      %s89 = sphi 0, %s75
      %s93 = sphi 0, %s93
      %s95 = sphi 0, %s93
      %s96 = sphi 0, %s95
      %s110 = sphi 0, %s96
      %s114 = sphi 0, %s114
      %s116 = sphi 0, %s114
      %s117 = sphi 0, %s116
      %s131 = sphi 0, %s117
      %s135 = sphi 0, %s135
      %s137 = sphi 0, %s135
      %s138 = sphi 0, %s137
      %s152 = sphi 0, %s138
      %s158 = sphi 0, %s160
      %s161 = sphi 0, %s158
      %s162 = sphi 0, %s161
      %s178 = sphi 0, %s162
      %s184 = sphi 0, %s186
      %s187 = sphi 0, %s184
      %s188 = sphi 0, %s187
      %s204 = sphi 0, %s188
      %s210 = sphi 0, %s212
      %s213 = sphi 0, %s210
      %s214 = sphi 0, %s213
      %s230 = sphi 0, %s214
      %s236 = sphi 0, %s238
      %s239 = sphi 0, %s236
      %s240 = sphi 0, %s239
      %s256 = sphi 0, %s240
      %s262 = sphi 0, %s264
      %s265 = sphi 0, %s262
      %s266 = sphi 0, %s265
      %s282 = sphi 0, %s266
      %s288 = sphi 0, %s290
      %s291 = sphi 0, %s288
      %s292 = sphi 0, %s291
      %s308 = sphi 0, %s292
      %s312 = sphi 0, %s312
      %s314 = sphi 0, %s312
      %s315 = sphi 0, %s314
      %s329 = sphi 0, %s315
    $region4: #{tpu_custom_call.1} parent=1 // loop_header_branch
      %25 = sbr.rel (%p23) target = $region8
    $region5: #{tpu_custom_call.1} parent=1 // loop_body
      %s27 = ssub.s32 %s22, 1
      %s28 = ssub.s32 %s22, 2
      %s29 = sadd.s32 %s22, 1
      %s31 = sadd.s32 %s30, 1
      %p34 = scmp.eq.s32.totalorder %s22, 1
      %p35 = scmp.ne.s32.totalorder %s30, %s32
      %p36 = scmp.eq.s32.totalorder %s22, 0
      %p37 = por %p35, %p36
      %p38 = scmp.ne.s32.totalorder %s30, %s32
      %p39 = scmp.eq.s32.totalorder %s27, 1
      %p40 = por %p38, %p39
      %p41 = scmp.ne.s32.totalorder %s32, %s33
      %p42 = scmp.eq.s32.totalorder %s27, 0
      %p43 = por %p41, %p42
      %p44 = scmp.ne.s32.totalorder %s32, %s33
      %p45 = scmp.eq.s32.totalorder %s28, 1
      %p46 = por %p44, %p45
      %p48 = scmp.ne.s32.totalorder %s33, %s47
      %p49 = scmp.eq.s32.totalorder %s28, 0
      %p50 = por %p48, %p49
      %s52 = sadd.s32 %s51, 1
      %p55 = scmp.eq.s32.totalorder %s22, 1
      %p56 = scmp.ne.s32.totalorder %s51, %s53
      %p57 = scmp.eq.s32.totalorder %s22, 0
      %p58 = por %p56, %p57
      %p59 = scmp.ne.s32.totalorder %s51, %s53
      %p60 = scmp.eq.s32.totalorder %s27, 1
      %p61 = por %p59, %p60
      %p62 = scmp.ne.s32.totalorder %s53, %s54
      %p63 = scmp.eq.s32.totalorder %s27, 0
      %p64 = por %p62, %p63
      %p65 = scmp.ne.s32.totalorder %s53, %s54
      %p66 = scmp.eq.s32.totalorder %s28, 1
      %p67 = por %p65, %p66
      %p69 = scmp.ne.s32.totalorder %s54, %s68
      %p70 = scmp.eq.s32.totalorder %s28, 0
      %p71 = por %p69, %p70
      %s73 = sadd.s32 %s72, 1
      %p76 = scmp.eq.s32.totalorder %s22, 1
      %p77 = scmp.ne.s32.totalorder %s72, %s74
      %p78 = scmp.eq.s32.totalorder %s22, 0
      %p79 = por %p77, %p78
      %p80 = scmp.ne.s32.totalorder %s72, %s74
      %p81 = scmp.eq.s32.totalorder %s27, 1
      %p82 = por %p80, %p81
      %p83 = scmp.ne.s32.totalorder %s74, %s75
      %p84 = scmp.eq.s32.totalorder %s27, 0
      %p85 = por %p83, %p84
      %p86 = scmp.ne.s32.totalorder %s74, %s75
      %p87 = scmp.eq.s32.totalorder %s28, 1
      %p88 = por %p86, %p87
      %p90 = scmp.ne.s32.totalorder %s75, %s89
      %p91 = scmp.eq.s32.totalorder %s28, 0
      %p92 = por %p90, %p91
      %s94 = sadd.s32 %s93, 1
      %p97 = scmp.eq.s32.totalorder %s22, 1
      %p98 = scmp.ne.s32.totalorder %s93, %s95
      %p99 = scmp.eq.s32.totalorder %s22, 0
      %p100 = por %p98, %p99
      %p101 = scmp.ne.s32.totalorder %s93, %s95
      %p102 = scmp.eq.s32.totalorder %s27, 1
      %p103 = por %p101, %p102
      %p104 = scmp.ne.s32.totalorder %s95, %s96
      %p105 = scmp.eq.s32.totalorder %s27, 0
      %p106 = por %p104, %p105
      %p107 = scmp.ne.s32.totalorder %s95, %s96
      %p108 = scmp.eq.s32.totalorder %s28, 1
      %p109 = por %p107, %p108
      %p111 = scmp.ne.s32.totalorder %s96, %s110
      %p112 = scmp.eq.s32.totalorder %s28, 0
      %p113 = por %p111, %p112
      %s115 = sadd.s32 %s114, 1
      %p118 = scmp.eq.s32.totalorder %s22, 1
      %p119 = scmp.ne.s32.totalorder %s114, %s116
      %p120 = scmp.eq.s32.totalorder %s22, 0
      %p121 = por %p119, %p120
      %p122 = scmp.ne.s32.totalorder %s114, %s116
      %p123 = scmp.eq.s32.totalorder %s27, 1
      %p124 = por %p122, %p123
      %p125 = scmp.ne.s32.totalorder %s116, %s117
      %p126 = scmp.eq.s32.totalorder %s27, 0
      %p127 = por %p125, %p126
      %p128 = scmp.ne.s32.totalorder %s116, %s117
      %p129 = scmp.eq.s32.totalorder %s28, 1
      %p130 = por %p128, %p129
      %p132 = scmp.ne.s32.totalorder %s117, %s131
      %p133 = scmp.eq.s32.totalorder %s28, 0
      %p134 = por %p132, %p133
      %s136 = sadd.s32 %s135, 1
      %p139 = scmp.eq.s32.totalorder %s22, 1
      %p140 = scmp.ne.s32.totalorder %s135, %s137
      %p141 = scmp.eq.s32.totalorder %s22, 0
      %p142 = por %p140, %p141
      %p143 = scmp.ne.s32.totalorder %s135, %s137
      %p144 = scmp.eq.s32.totalorder %s27, 1
      %p145 = por %p143, %p144
      %p146 = scmp.ne.s32.totalorder %s137, %s138
      %p147 = scmp.eq.s32.totalorder %s27, 0
      %p148 = por %p146, %p147
      %p149 = scmp.ne.s32.totalorder %s137, %s138
      %p150 = scmp.eq.s32.totalorder %s28, 1
      %p151 = por %p149, %p150
      %p153 = scmp.ne.s32.totalorder %s138, %s152
      %p154 = scmp.eq.s32.totalorder %s28, 0
      %p155 = por %p153, %p154
      %s156 = ssub.s32 %s22, %s29
      %p157 = scmp.eq.s32.totalorder %s156, 0
      %s159 = sadd.s32 %s158, 1
      %s160 = scalar_select %p157, %s158, %s159
      %p163 = pneg %p157
      %p164 = scmp.eq.s32.totalorder %s22, 1
      %p165 = por %p163, %p164
      %p166 = scmp.ne.s32.totalorder %s158, %s161
      %p167 = scmp.eq.s32.totalorder %s22, 0
      %p168 = por %p166, %p167
      %p169 = scmp.ne.s32.totalorder %s158, %s161
      %p170 = scmp.eq.s32.totalorder %s27, 1
      %p171 = por %p169, %p170
      %p172 = scmp.ne.s32.totalorder %s161, %s162
      %p173 = scmp.eq.s32.totalorder %s27, 0
      %p174 = por %p172, %p173
      %p175 = scmp.ne.s32.totalorder %s161, %s162
      %p176 = scmp.eq.s32.totalorder %s28, 1
      %p177 = por %p175, %p176
      %p179 = scmp.ne.s32.totalorder %s162, %s178
      %p180 = scmp.eq.s32.totalorder %s28, 0
      %p181 = por %p179, %p180
      %s182 = ssub.s32 %s22, %s29
      %p183 = scmp.eq.s32.totalorder %s182, 0
      %s185 = sadd.s32 %s184, 1
      %s186 = scalar_select %p183, %s184, %s185
      %p189 = pneg %p183
      %p190 = scmp.eq.s32.totalorder %s22, 1
      %p191 = por %p189, %p190
      %p192 = scmp.ne.s32.totalorder %s184, %s187
      %p193 = scmp.eq.s32.totalorder %s22, 0
      %p194 = por %p192, %p193
      %p195 = scmp.ne.s32.totalorder %s184, %s187
      %p196 = scmp.eq.s32.totalorder %s27, 1
      %p197 = por %p195, %p196
      %p198 = scmp.ne.s32.totalorder %s187, %s188
      %p199 = scmp.eq.s32.totalorder %s27, 0
      %p200 = por %p198, %p199
      %p201 = scmp.ne.s32.totalorder %s187, %s188
      %p202 = scmp.eq.s32.totalorder %s28, 1
      %p203 = por %p201, %p202
      %p205 = scmp.ne.s32.totalorder %s188, %s204
      %p206 = scmp.eq.s32.totalorder %s28, 0
      %p207 = por %p205, %p206
      %s208 = ssub.s32 %s22, %s29
      %p209 = scmp.eq.s32.totalorder %s208, 0
      %s211 = sadd.s32 %s210, 1
      %s212 = scalar_select %p209, %s210, %s211
      %p215 = pneg %p209
      %p216 = scmp.eq.s32.totalorder %s22, 1
      %p217 = por %p215, %p216
      %p218 = scmp.ne.s32.totalorder %s210, %s213
      %p219 = scmp.eq.s32.totalorder %s22, 0
      %p220 = por %p218, %p219
      %p221 = scmp.ne.s32.totalorder %s210, %s213
      %p222 = scmp.eq.s32.totalorder %s27, 1
      %p223 = por %p221, %p222
      %p224 = scmp.ne.s32.totalorder %s213, %s214
      %p225 = scmp.eq.s32.totalorder %s27, 0
      %p226 = por %p224, %p225
      %p227 = scmp.ne.s32.totalorder %s213, %s214
      %p228 = scmp.eq.s32.totalorder %s28, 1
      %p229 = por %p227, %p228
      %p231 = scmp.ne.s32.totalorder %s214, %s230
      %p232 = scmp.eq.s32.totalorder %s28, 0
      %p233 = por %p231, %p232
      %s234 = ssub.s32 %s22, %s29
      %p235 = scmp.eq.s32.totalorder %s234, 0
      %s237 = sadd.s32 %s236, 1
      %s238 = scalar_select %p235, %s236, %s237
      %p241 = pneg %p235
      %p242 = scmp.eq.s32.totalorder %s22, 1
      %p243 = por %p241, %p242
      %p244 = scmp.ne.s32.totalorder %s236, %s239
      %p245 = scmp.eq.s32.totalorder %s22, 0
      %p246 = por %p244, %p245
      %p247 = scmp.ne.s32.totalorder %s236, %s239
      %p248 = scmp.eq.s32.totalorder %s27, 1
      %p249 = por %p247, %p248
      %p250 = scmp.ne.s32.totalorder %s239, %s240
      %p251 = scmp.eq.s32.totalorder %s27, 0
      %p252 = por %p250, %p251
      %p253 = scmp.ne.s32.totalorder %s239, %s240
      %p254 = scmp.eq.s32.totalorder %s28, 1
      %p255 = por %p253, %p254
      %p257 = scmp.ne.s32.totalorder %s240, %s256
      %p258 = scmp.eq.s32.totalorder %s28, 0
      %p259 = por %p257, %p258
      %s260 = ssub.s32 %s22, %s29
      %p261 = scmp.eq.s32.totalorder %s260, 0
      %s263 = sadd.s32 %s262, 1
      %s264 = scalar_select %p261, %s262, %s263
      %p267 = pneg %p261
      %p268 = scmp.eq.s32.totalorder %s22, 1
      %p269 = por %p267, %p268
      %p270 = scmp.ne.s32.totalorder %s262, %s265
      %p271 = scmp.eq.s32.totalorder %s22, 0
      %p272 = por %p270, %p271
      %p273 = scmp.ne.s32.totalorder %s262, %s265
      %p274 = scmp.eq.s32.totalorder %s27, 1
      %p275 = por %p273, %p274
      %p276 = scmp.ne.s32.totalorder %s265, %s266
      %p277 = scmp.eq.s32.totalorder %s27, 0
      %p278 = por %p276, %p277
      %p279 = scmp.ne.s32.totalorder %s265, %s266
      %p280 = scmp.eq.s32.totalorder %s28, 1
      %p281 = por %p279, %p280
      %p283 = scmp.ne.s32.totalorder %s266, %s282
      %p284 = scmp.eq.s32.totalorder %s28, 0
      %p285 = por %p283, %p284
      %s286 = ssub.s32 %s22, %s29
      %p287 = scmp.eq.s32.totalorder %s286, 0
      %s289 = sadd.s32 %s288, 1
      %s290 = scalar_select %p287, %s288, %s289
      %p293 = pneg %p287
      %p294 = scmp.eq.s32.totalorder %s22, 1
      %p295 = por %p293, %p294
      %p296 = scmp.ne.s32.totalorder %s288, %s291
      %p297 = scmp.eq.s32.totalorder %s22, 0
      %p298 = por %p296, %p297
      %p299 = scmp.ne.s32.totalorder %s288, %s291
      %p300 = scmp.eq.s32.totalorder %s27, 1
      %p301 = por %p299, %p300
      %p302 = scmp.ne.s32.totalorder %s291, %s292
      %p303 = scmp.eq.s32.totalorder %s27, 0
      %p304 = por %p302, %p303
      %p305 = scmp.ne.s32.totalorder %s291, %s292
      %p306 = scmp.eq.s32.totalorder %s28, 1
      %p307 = por %p305, %p306
      %p309 = scmp.ne.s32.totalorder %s292, %s308
      %p310 = scmp.eq.s32.totalorder %s28, 0
      %p311 = por %p309, %p310
      %s313 = sadd.s32 %s312, 1
      %p316 = scmp.eq.s32.totalorder %s22, 1
      %p317 = scmp.ne.s32.totalorder %s312, %s314
      %p318 = scmp.eq.s32.totalorder %s22, 0
      %p319 = por %p317, %p318
      %p320 = scmp.ne.s32.totalorder %s312, %s314
      %p321 = scmp.eq.s32.totalorder %s27, 1
      %p322 = por %p320, %p321
      %p323 = scmp.ne.s32.totalorder %s314, %s315
      %p324 = scmp.eq.s32.totalorder %s27, 0
      %p325 = por %p323, %p324
      %p326 = scmp.ne.s32.totalorder %s314, %s315
      %p327 = scmp.eq.s32.totalorder %s28, 1
      %p328 = por %p326, %p327
      %p330 = scmp.ne.s32.totalorder %s315, %s329
      %p331 = scmp.eq.s32.totalorder %s28, 0
      %p332 = por %p330, %p331
      %p333 = scmp.le.s32.totalorder 1, %s22
      %p334 = scmp.lt.s32.totalorder %s22, 3
      %p335 = pnand %p333, %p334
      %p336 = pneg %p335
      // Predicated region
      $region9: #{tpu_custom_call.1} parent=5 // pred_check
        _
      $region10: #{tpu_custom_call.1} parent=5 // pred_check_branch
        %338 = sbr.rel (%p335) target = $region12
      $region11: #{tpu_custom_call.1} parent=5 // pred_region
        %s339 = ssub.s32 %s22, 1
        // Predicated region
        $region13: #{tpu_custom_call.1} parent=11 // pred_check
          %p340 = pneg %p43
        $region14: #{tpu_custom_call.1} parent=11 // pred_check_branch
          %342 = sbr.rel (%p340) target = $region16
        $region15: #{tpu_custom_call.1} parent=11 // pred_region
          %s344 = ssub.s32 256, 256
          %345 = vsyncadd [#allocation4], %s344
          %s346 = sshll.u32 [#allocation3], 4
          %s347 = int_to_ptr.vmem [resolvable:$true] %s346
          %352 = dma.hbm_to_vmem [thread:$0]  %s0, 256, %s347, [#allocation4], 128, 128, 8
        $region16: #{tpu_custom_call.1} parent=11 // pred_fallthru
          _
        // Predicated region
        $region17: #{tpu_custom_call.1} parent=11 // pred_check
          %p353 = pneg %p64
        $region18: #{tpu_custom_call.1} parent=11 // pred_check_branch
          %355 = sbr.rel (%p353) target = $region20
        $region19: #{tpu_custom_call.1} parent=11 // pred_region
          %s357 = ssub.s32 128, 128
          %358 = vsyncadd [#allocation7], %s357
          %s359 = sshll.u32 [#allocation6], 4
          %s360 = int_to_ptr.vmem [resolvable:$true] %s359
          %365 = dma.hbm_to_vmem [thread:$0]  %s1, 128, %s360, [#allocation7], 64, 64, 4
        $region20: #{tpu_custom_call.1} parent=11 // pred_fallthru
          _
        // Predicated region
        $region21: #{tpu_custom_call.1} parent=11 // pred_check
          %p366 = pneg %p85
        $region22: #{tpu_custom_call.1} parent=11 // pred_check_branch
          %368 = sbr.rel (%p366) target = $region24
        $region23: #{tpu_custom_call.1} parent=11 // pred_region
          %s370 = ssub.s32 1024, 1024
          %371 = vsyncadd [#allocation7], %s370
          %s372 = sshll.u32 [#allocation8], 4
          %s373 = int_to_ptr.vmem [resolvable:$true] %s372
          %378 = dma.hbm_to_vmem [thread:$0]  %s2, 1024, %s373, [#allocation7], 64, 64, 4
        $region24: #{tpu_custom_call.1} parent=11 // pred_fallthru
          _
        // Predicated region
        $region25: #{tpu_custom_call.1} parent=11 // pred_check
          %p379 = pneg %p106
        $region26: #{tpu_custom_call.1} parent=11 // pred_check_branch
          %381 = sbr.rel (%p379) target = $region28
        $region27: #{tpu_custom_call.1} parent=11 // pred_region
          _
        $region28: #{tpu_custom_call.1} parent=11 // pred_fallthru
          _
        // Predicated region
        $region29: #{tpu_custom_call.1} parent=11 // pred_check
          %p382 = pneg %p127
        $region30: #{tpu_custom_call.1} parent=11 // pred_check_branch
          %384 = sbr.rel (%p382) target = $region32
        $region31: #{tpu_custom_call.1} parent=11 // pred_region
          %s386 = ssub.s32 1024, 1024
          %387 = vsyncadd [#allocation10], %s386
          %s388 = sshll.u32 [#allocation9], 4
          %s389 = int_to_ptr.vmem [resolvable:$true] %s388
          %394 = dma.hbm_to_vmem [thread:$0]  %s4, 1024, %s389, [#allocation10], 64, 64, 4
        $region32: #{tpu_custom_call.1} parent=11 // pred_fallthru
          _
        // Predicated region
        $region33: #{tpu_custom_call.1} parent=11 // pred_check
          %p395 = pneg %p148
        $region34: #{tpu_custom_call.1} parent=11 // pred_check_branch
          %397 = sbr.rel (%p395) target = $region36
        $region35: #{tpu_custom_call.1} parent=11 // pred_region
          _
        $region36: #{tpu_custom_call.1} parent=11 // pred_fallthru
          _
      $region12: #{tpu_custom_call.1} parent=5 // pred_fallthru
        _
      %p398 = scmp.lt.s32.totalorder %s22, 2
      // Predicated region
      $region37: #{tpu_custom_call.1} parent=5 // pred_check
        %p399 = pneg %p398
      $region38: #{tpu_custom_call.1} parent=5 // pred_check_branch
        %401 = sbr.rel (%p399) target = $region40
      $region39: #{tpu_custom_call.1} parent=5 // pred_region
        // Predicated region
        $region41: #{tpu_custom_call.1} parent=39 // pred_check
          %p402 = pneg %p168
        $region42: #{tpu_custom_call.1} parent=39 // pred_check_branch
          %404 = sbr.rel (%p402) target = $region44
        $region43: #{tpu_custom_call.1} parent=39 // pred_region
          %p405 = scmp.lt.s32.totalorder %s22, 1
          %s406 = scalar_select %p405, %s22, 1
          %s407 = scalar_lea.vmem %s6, %s406
        $region44: #{tpu_custom_call.1} parent=39 // pred_fallthru
          _
        // Predicated region
        $region45: #{tpu_custom_call.1} parent=39 // pred_check
          %p408 = pneg %p194
        $region46: #{tpu_custom_call.1} parent=39 // pred_check_branch
          %410 = sbr.rel (%p408) target = $region48
        $region47: #{tpu_custom_call.1} parent=39 // pred_region
          %p411 = scmp.lt.s32.totalorder %s22, 1
          %s412 = scalar_select %p411, %s22, 1
          %s413 = scalar_lea.vmem %s7, %s412
        $region48: #{tpu_custom_call.1} parent=39 // pred_fallthru
          _
        // Predicated region
        $region49: #{tpu_custom_call.1} parent=39 // pred_check
          %p414 = pneg %p220
        $region50: #{tpu_custom_call.1} parent=39 // pred_check_branch
          %416 = sbr.rel (%p414) target = $region52
        $region51: #{tpu_custom_call.1} parent=39 // pred_region
          %s417 = sand.u32 %s22, 1
          %s418 = scalar_lea.sflag [#allocation4], %s417
          %s419 = sand.u32 %s210, 1
          %s420 = smul.addr %s419, 64
          %s421 = scalar_lea.vmem [#allocation11], %s420
          %s423 = ssub.s32 1024, 1024
          %424 = vsyncadd %s418, %s423
          %s425 = smul.addr %s22, 16
          %s426 = smul.addr %s425, 64
          %s427 = scalar_lea.hbm %s8, %s426
          %s428 = sshll.u32 %s421, 4
          %s429 = int_to_ptr.vmem [resolvable:$true] %s428
          %434 = dma.hbm_to_vmem [thread:$0]  %s427, 1024, %s429, %s418, 64, 64, 4
        $region52: #{tpu_custom_call.1} parent=39 // pred_fallthru
          _
        // Predicated region
        $region53: #{tpu_custom_call.1} parent=39 // pred_check
          %p435 = pneg %p246
        $region54: #{tpu_custom_call.1} parent=39 // pred_check_branch
          %437 = sbr.rel (%p435) target = $region56
        $region55: #{tpu_custom_call.1} parent=39 // pred_region
          %p438 = scmp.lt.s32.totalorder %s22, 1
          %s439 = scalar_select %p438, %s22, 1
          %s440 = scalar_lea.vmem %s9, %s439
        $region56: #{tpu_custom_call.1} parent=39 // pred_fallthru
          _
        // Predicated region
        $region57: #{tpu_custom_call.1} parent=39 // pred_check
          %p441 = pneg %p272
        $region58: #{tpu_custom_call.1} parent=39 // pred_check_branch
          %443 = sbr.rel (%p441) target = $region60
        $region59: #{tpu_custom_call.1} parent=39 // pred_region
          %p444 = scmp.lt.s32.totalorder %s22, 1
          %s445 = scalar_select %p444, %s22, 1
          %s446 = scalar_lea.vmem %s10, %s445
        $region60: #{tpu_custom_call.1} parent=39 // pred_fallthru
          _
        // Predicated region
        $region61: #{tpu_custom_call.1} parent=39 // pred_check
          %p447 = pneg %p298
        $region62: #{tpu_custom_call.1} parent=39 // pred_check_branch
          %449 = sbr.rel (%p447) target = $region64
        $region63: #{tpu_custom_call.1} parent=39 // pred_region
          %s450 = sand.u32 %s22, 1
          %s451 = scalar_lea.sflag [#allocation4], %s450
          %s452 = sand.u32 %s288, 1
          %s453 = smul.addr %s452, 64
          %s454 = scalar_lea.vmem [#allocation12], %s453
          %s456 = ssub.s32 1024, 1024
          %457 = vsyncadd %s451, %s456
          %s458 = smul.addr %s22, 16
          %s459 = smul.addr %s458, 64
          %s460 = scalar_lea.hbm %s11, %s459
          %s461 = sshll.u32 %s454, 4
          %s462 = int_to_ptr.vmem [resolvable:$true] %s461
          %467 = dma.hbm_to_vmem [thread:$0]  %s460, 1024, %s462, %s451, 64, 64, 4
        $region64: #{tpu_custom_call.1} parent=39 // pred_fallthru
          _
      $region40: #{tpu_custom_call.1} parent=5 // pred_fallthru
        _
      %p468 = scmp.le.s32.totalorder 1, %s22
      %p469 = scmp.lt.s32.totalorder %s22, 3
      %p470 = pnand %p468, %p469
      %p471 = pneg %p470
      // Predicated region
      $region65: #{tpu_custom_call.1} parent=5 // pred_check
        _
      $region66: #{tpu_custom_call.1} parent=5 // pred_check_branch
        %473 = sbr.rel (%p470) target = $region68
      $region67: #{tpu_custom_call.1} parent=5 // pred_region
        %s474 = ssub.s32 %s22, 1
        // Predicated region
        $region69: #{tpu_custom_call.1} parent=67 // pred_check
          %p475 = pneg %p43
        $region70: #{tpu_custom_call.1} parent=67 // pred_check_branch
          %477 = sbr.rel (%p475) target = $region72
        $region71: #{tpu_custom_call.1} parent=67 // pred_region
          %478 = dma.done [#allocation4], 256
        $region72: #{tpu_custom_call.1} parent=67 // pred_fallthru
          _
        // Predicated region
        $region73: #{tpu_custom_call.1} parent=67 // pred_check
          %p479 = pneg %p64
        $region74: #{tpu_custom_call.1} parent=67 // pred_check_branch
          %481 = sbr.rel (%p479) target = $region76
        $region75: #{tpu_custom_call.1} parent=67 // pred_region
          %482 = dma.done [#allocation7], 128
        $region76: #{tpu_custom_call.1} parent=67 // pred_fallthru
          _
        // Predicated region
        $region77: #{tpu_custom_call.1} parent=67 // pred_check
          %p483 = pneg %p85
        $region78: #{tpu_custom_call.1} parent=67 // pred_check_branch
          %485 = sbr.rel (%p483) target = $region80
        $region79: #{tpu_custom_call.1} parent=67 // pred_region
          %486 = dma.done [#allocation7], 1024
        $region80: #{tpu_custom_call.1} parent=67 // pred_fallthru
          _
        // Predicated region
        $region81: #{tpu_custom_call.1} parent=67 // pred_check
          %p487 = pneg %p127
        $region82: #{tpu_custom_call.1} parent=67 // pred_check_branch
          %489 = sbr.rel (%p487) target = $region84
        $region83: #{tpu_custom_call.1} parent=67 // pred_region
          %490 = dma.done [#allocation10], 1024
        $region84: #{tpu_custom_call.1} parent=67 // pred_fallthru
          _
        %s491 = sand.u32 %s27, 1
        %s492 = scalar_lea.sflag [#allocation4], %s491
        %s493 = sand.u32 %s213, 1
        %s494 = smul.addr %s493, 64
        %s495 = scalar_lea.vmem [#allocation11], %s494
        // Predicated region
        $region85: #{tpu_custom_call.1} parent=67 // pred_check
          %p496 = pneg %p226
        $region86: #{tpu_custom_call.1} parent=67 // pred_check_branch
          %498 = sbr.rel (%p496) target = $region88
        $region87: #{tpu_custom_call.1} parent=67 // pred_region
          %499 = dma.done %s492, 1024
        $region88: #{tpu_custom_call.1} parent=67 // pred_fallthru
          _
        %s500 = sand.u32 %s27, 1
        %s501 = scalar_lea.sflag [#allocation4], %s500
        %s502 = sand.u32 %s291, 1
        %s503 = smul.addr %s502, 64
        %s504 = scalar_lea.vmem [#allocation12], %s503
        // Predicated region
        $region89: #{tpu_custom_call.1} parent=67 // pred_check
          %p505 = pneg %p304
        $region90: #{tpu_custom_call.1} parent=67 // pred_check_branch
          %507 = sbr.rel (%p505) target = $region92
        $region91: #{tpu_custom_call.1} parent=67 // pred_region
          %508 = dma.done %s501, 1024
        $region92: #{tpu_custom_call.1} parent=67 // pred_fallthru
          _
        %p509 = pneg %p43
        %p510 = pneg %p40
        %p511 = pneg %p64
        %p512 = pneg %p61
        %p513 = pneg %p85
        %p514 = pneg %p82
        %p515 = pneg %p106
        %p516 = pneg %p103
        %p517 = pneg %p127
        %p518 = pneg %p124
        %p519 = pneg %p148
        %p520 = pneg %p145
        %p521 = scmp.lt.s32.totalorder %s27, 1
        %s522 = scalar_select %p521, %s27, 1
        %s523 = scalar_lea.vmem %s6, %s522
        %p524 = pneg %p174
        %p525 = pneg %p171
        %p526 = scmp.lt.s32.totalorder %s27, 1
        %s527 = scalar_select %p526, %s27, 1
        %s528 = scalar_lea.vmem %s7, %s527
        %p529 = pneg %p200
        %p530 = pneg %p197
        %s531 = sand.u32 %s27, 1
        %s532 = scalar_lea.sflag [#allocation4], %s531
        %s533 = sand.u32 %s213, 1
        %s534 = smul.addr %s533, 64
        %s535 = scalar_lea.vmem [#allocation11], %s534
        %p536 = pneg %p226
        %p537 = pneg %p223
        %p538 = scmp.lt.s32.totalorder %s27, 1
        %s539 = scalar_select %p538, %s27, 1
        %s540 = scalar_lea.vmem %s9, %s539
        %p541 = pneg %p252
        %p542 = pneg %p249
        %p543 = scmp.lt.s32.totalorder %s27, 1
        %s544 = scalar_select %p543, %s27, 1
        %s545 = scalar_lea.vmem %s10, %s544
        %p546 = pneg %p278
        %p547 = pneg %p275
        %s548 = sand.u32 %s27, 1
        %s549 = scalar_lea.sflag [#allocation4], %s548
        %s550 = sand.u32 %s291, 1
        %s551 = smul.addr %s550, 64
        %s552 = scalar_lea.vmem [#allocation12], %s551
        %p553 = pneg %p304
        %p554 = pneg %p301
        %p555 = pneg %p325
        %p556 = pneg %p322
        %p557 = scmp.lt.s32.totalorder %s27, 1
        %s558 = scalar_select %p557, %s27, 1
        %s559 = scalar_lea.vmem %s6, %s558
        %p560 = scmp.lt.s32.totalorder %s27, 1
        %s561 = scalar_select %p560, %s27, 1
        %s562 = scalar_lea.vmem %s7, %s561
        %p563 = scmp.lt.s32.totalorder %s27, 1
        %s564 = scalar_select %p563, %s27, 1
        %s565 = scalar_lea.vmem %s9, %s564
        %p566 = scmp.lt.s32.totalorder %s27, 1
        %s567 = scalar_select %p566, %s27, 1
        %s568 = scalar_lea.vmem %s10, %s567
        %p570 = scmp.eq.s32.totalorder %s27, 0
        // Predicated region
        $region93: #{tpu_custom_call.1} parent=67 // pred_check
          %p571 = pneg %p570
        $region94: #{tpu_custom_call.1} parent=67 // pred_check_branch
          %573 = sbr.rel (%p571) target = $region96
        $region95: #{tpu_custom_call.1} parent=67 // pred_region
          %v574 = vld [vmem:[#allocation3] sm:$0xff]
          %v575 = vld [vmem:[#allocation3 + $0x8] sm:$0xff]
          %v576 = vpack.c.bf16 %v575, %v574
          %v577 = vld [vmem:[#allocation8] sm:$0xf]
          %v578 = vld [vmem:[#allocation8 + $0x4] sm:$0xf]
          %v579 = vld [vmem:[#allocation8 + $0x8] sm:$0xf]
          %v580 = vld [vmem:[#allocation8 + $0xc] sm:$0xf]
          %v581 = vld [vmem:[#allocation8 + $0x10] sm:$0xf]
          %v582 = vld [vmem:[#allocation8 + $0x14] sm:$0xf]
          %v583 = vld [vmem:[#allocation8 + $0x18] sm:$0xf]
          %v584 = vld [vmem:[#allocation8 + $0x1c] sm:$0xf]
          %v585 = vld [vmem:[#allocation8 + $0x20] sm:$0xf]
          %v586 = vld [vmem:[#allocation8 + $0x24] sm:$0xf]
          %v587 = vld [vmem:[#allocation8 + $0x28] sm:$0xf]
          %v588 = vld [vmem:[#allocation8 + $0x2c] sm:$0xf]
          %v589 = vld [vmem:[#allocation8 + $0x30] sm:$0xf]
          %v590 = vld [vmem:[#allocation8 + $0x34] sm:$0xf]
          %v591 = vld [vmem:[#allocation8 + $0x38] sm:$0xf]
          %v592 = vld [vmem:[#allocation8 + $0x3c] sm:$0xf]
          %v593 = vld [vmem:[%s3] sm:$0x1]
          %v595 = vlaneseq
          %v596 = vshrl.u32 %v595, 7
          %v597 = vsub.s32 0, %v596
          %v598 = vrot.slane %v593, %v597
          %v616 = vunpack.c.l.b16 %v577
          %v617 = vunpack.c.l.b16 %v578
          %v618 = vunpack.c.l.b16 %v579
          %v619 = vunpack.c.l.b16 %v580
          %v620 = vunpack.c.l.b16 %v581
          %v621 = vunpack.c.l.b16 %v582
          %v622 = vunpack.c.l.b16 %v583
          %v623 = vunpack.c.l.b16 %v584
          %v624 = vunpack.c.l.b16 %v585
          %v625 = vunpack.c.l.b16 %v586
          %v626 = vunpack.c.l.b16 %v587
          %v627 = vunpack.c.l.b16 %v588
          %v628 = vunpack.c.l.b16 %v589
          %v629 = vunpack.c.l.b16 %v590
          %v630 = vunpack.c.l.b16 %v591
          %v631 = vunpack.c.l.b16 %v592
          %v632 = vpack.c.b16 %v617, %v616
          %v633 = vpack.c.b16 %v619, %v618
          %v634 = vpack.c.b16 %v621, %v620
          %v635 = vpack.c.b16 %v623, %v622
          %v636 = vpack.c.b16 %v625, %v624
          %v637 = vpack.c.b16 %v627, %v626
          %v638 = vpack.c.b16 %v629, %v628
          %v639 = vpack.c.b16 %v631, %v630
          %648 = vmatprep.subr.bf16.mxu0 0
          %649 = vmatpush1.bf16.msra.mxu0 %v632
          %650 = vmatprep.subr.bf16.mxu0 0
          %651 = vmatpush1.bf16.msra.mxu0 %v633
          %652 = vmatprep.subr.bf16.mxu0 0
          %653 = vmatpush1.bf16.msra.mxu0 %v634
          %654 = vmatprep.subr.bf16.mxu0 0
          %655 = vmatpush1.bf16.msra.mxu0 %v635
          %656 = vmatprep.subr.bf16.mxu0 0
          %657 = vmatpush1.bf16.msra.mxu0 %v636
          %658 = vmatprep.subr.bf16.mxu0 0
          %659 = vmatpush1.bf16.msra.mxu0 %v637
          %660 = vmatprep.subr.bf16.mxu0 0
          %661 = vmatpush1.bf16.msra.mxu0 %v638
          %662 = vmatprep.subr.bf16.mxu0 0
          %663 = vmatpush1.bf16.msra.mxu0 %v639
          %664 = vmatprep.subr.bf16.mxu0 0
          %665 = vmatpush1.bf16.msra.mxu0 0
          %666 = vmatprep.subr.bf16.mxu0 0
          %667 = vmatpush1.bf16.msra.mxu0 0
          %668 = vmatprep.subr.bf16.mxu0 0
          %669 = vmatpush1.bf16.msra.mxu0 0
          %670 = vmatprep.subr.bf16.mxu0 0
          %671 = vmatpush1.bf16.msra.mxu0 0
          %672 = vmatprep.subr.bf16.mxu0 0
          %673 = vmatpush1.bf16.msra.mxu0 0
          %674 = vmatprep.subr.bf16.mxu0 0
          %675 = vmatpush1.bf16.msra.mxu0 0
          %676 = vmatprep.subr.bf16.mxu0 0
          %677 = vmatpush1.bf16.msra.mxu0 0
          %678 = vmatprep.subr.bf16.mxu0 0
          %679 = vmatpush1.bf16.msra.mxu0 0
          %680 = vmatprep.mubr.bf16.mxu0 0
          %681 = vmatmul.mubr.bf16.gmra.mrb[0].mxu0 %v576
          %v682 = vpop.f32.mrb[0].mxu0
          %v683 = vadd.f32 %v598, %v682
          %v684 = vpop.f32.mrb[0].mxu0
          %v685 = vpop.f32.mrb[0].mxu0
          %v686 = vadd.f32 %v598, %v685
          %v687 = vpop.f32.mrb[0].mxu0
          %688 = vdwg.mxu0
          %689 = vst [vmem:[#allocation2] sm:$0xff] %v683
          %690 = vst [vmem:[#allocation2 + $0x8] sm:$0xff] %v686
        $region96: #{tpu_custom_call.1} parent=67 // pred_fallthru
          _
        %v691 = vld [vmem:[#allocation2] sm:$0xff]
        %v692 = vld [vmem:[#allocation2 + $0x8] sm:$0xff]
        %v693 = vlaneseq
        %v694 = vand.u32 %v693, 127
        %vm695 = vcmp.lt.s32.totalorder %v694, 32
        %696 = vadd.xlane.f32.xlu0 %v691
        %v697 = vpop.xlane.xlu0 %696
        %698 = vadd.xlane.f32.xlu0 %v692
        %v699 = vpop.xlane.xlu0 %698
        %v700 = vmul.f32 %v697, 0.03125
        %v701 = vmul.f32 %v699, 0.03125
        %v702 = vsub.f32 %v691, %v700
        %v703 = vsub.f32 %v692, %v701
        %v704 = vsel %vm695, 1, 0
        %vm705 = vcmp.eq.s32.totalorder %v704, 1
        %v706 = vsel %vm705, %v702, 0.0
        %v707 = vsel %vm705, %v703, 0.0
        %v708 = vmul.f32 %v706, %v706
        %v709 = vmul.f32 %v707, %v707
        %710 = vadd.xlane.f32.xlu0 %v708
        %v711 = vpop.xlane.xlu0 %710
        %712 = vadd.xlane.f32.xlu0 %v709
        %v713 = vpop.xlane.xlu0 %712
        %v714 = vmul.f32 %v711, 0.03125
        %v715 = vmul.f32 %v713, 0.03125
        %v716 = vadd.f32 %v714, 1e-05
        %v717 = vadd.f32 %v715, 1e-05
        %v718 = vrsqrt.pop %v716
        %v719 = vrsqrt.pop %v717
        %v720 = vmul.f32 %v706, %v718
        %v721 = vmul.f32 %v707, %v719
        %v722 = vld [vmem:[%s559] sm:$0x1]
        %v724 = vlaneseq
        %v725 = vshrl.u32 %v724, 7
        %v726 = vsub.s32 0, %v725
        %v727 = vrot.slane %v722, %v726
        %v729 = vmul.f32 %v720, %v727
        %v730 = vmul.f32 %v721, %v727
        %v731 = vld [vmem:[%s562] sm:$0x1]
        %v733 = vlaneseq
        %v734 = vshrl.u32 %v733, 7
        %v735 = vsub.s32 0, %v734
        %v736 = vrot.slane %v731, %v735
        %v738 = vadd.f32 %v729, %v736
        %v739 = vadd.f32 %v730, %v736
        %v740 = vmax.f32 %v738, 0.0
        %v741 = vmax.f32 %v739, 0.0
        %v742 = vadd.f32 %v740, 1e-07
        %v743 = vadd.f32 %v741, 1e-07
        %v744 = vmax.f32 %v742, %v743
        %v745 = vrot.slane %v744, 4
        %v746 = vmax.f32 %v744, %v745
        %v747 = vrot.slane %v746, 2
        %v748 = vmax.f32 %v746, %v747
        %v749 = vrot.slane %v748, 1
        %v750 = vmax.f32 %v748, %v749
        %v751 = vsub.f32 %v742, %v750
        %v752 = vsub.f32 %v743, %v750
        %v753 = vmax.f32 %v751, -80.0
        %v754 = vmax.f32 %v752, -80.0
        %v755 = vmul.f32 %v753, 1.442695
        %v756 = vpow.pop %v755
        %v757 = vmul.f32 %v754, 1.442695
        %v758 = vpow.pop %v757
        %v759 = vmul.f32 %v756, %v742
        %v760 = vmul.f32 %v758, %v743
        %v761 = vpack.c.bf16 %v760, %v759
        %v762 = vpack.c.bf16 %v758, %v756
        %v763 = vld [vmem:[#allocation6] sm:$0xf]
        %v764 = vld [vmem:[#allocation6 + $0x4] sm:$0xf]
        %v767 = vunpack.c.l.b16 %v763
        %v768 = vunpack.c.l.b16 %v764
        %v769 = vpack.c.b16 %v768, %v767
        %vm770 = vcmask 130048
        %v772 = vsel %vm770, %v769, 0
        %774 = vmatprep.subr.bf16.mxu0 %v762
        %775 = vmatpush1.bf16.msra.mxu0 %v761
        %776 = vmatprep.subr.bf16.mxu0 0
        %777 = vmatpush1.bf16.msra.mxu0 0
        %778 = vmatprep.subr.bf16.mxu0 0
        %779 = vmatpush1.bf16.msra.mxu0 0
        %780 = vmatprep.subr.bf16.mxu0 0
        %781 = vmatpush1.bf16.msra.mxu0 0
        %782 = vmatprep.subr.bf16.mxu0 0
        %783 = vmatpush1.bf16.msra.mxu0 0
        %784 = vmatprep.subr.bf16.mxu0 0
        %785 = vmatpush1.bf16.msra.mxu0 0
        %786 = vmatprep.subr.bf16.mxu0 0
        %787 = vmatpush1.bf16.msra.mxu0 0
        %788 = vmatprep.subr.bf16.mxu0 0
        %789 = vmatpush1.bf16.msra.mxu0 0
        %790 = vmatprep.subr.bf16.mxu0 0
        %791 = vmatpush1.bf16.msra.mxu0 0
        %792 = vmatprep.subr.bf16.mxu0 0
        %793 = vmatpush1.bf16.msra.mxu0 0
        %794 = vmatprep.subr.bf16.mxu0 0
        %795 = vmatpush1.bf16.msra.mxu0 0
        %796 = vmatprep.subr.bf16.mxu0 0
        %797 = vmatpush1.bf16.msra.mxu0 0
        %798 = vmatprep.subr.bf16.mxu0 0
        %799 = vmatpush1.bf16.msra.mxu0 0
        %800 = vmatprep.subr.bf16.mxu0 0
        %801 = vmatpush1.bf16.msra.mxu0 0
        %802 = vmatprep.subr.bf16.mxu0 0
        %803 = vmatpush1.bf16.msra.mxu0 0
        %804 = vmatprep.subr.bf16.mxu0 0
        %805 = vmatpush1.bf16.msra.mxu0 0
        %806 = vmatprep.mubr.bf16.mxu0 0
        %807 = vmatmul.mubr.bf16.gmra.mrb[0].mxu0 %v772
        %v808 = vpop.f32.mrb[0].mxu0
        %v809 = vadd.f32 0.0, %v808
        %v810 = vpop.f32.mrb[0].mxu0
        %v811 = vadd.f32 0.0, %v810
        %v812 = vpop.f32.mrb[0].mxu0
        %v813 = vadd.f32 0.0, %v812
        %v814 = vpop.f32.mrb[0].mxu0
        %v815 = vadd.f32 0.0, %v814
        %816 = vdwg.mxu0
        %vm817 = vcmp.gt.f32.partialorder %v811, 0.0
        %vm818 = vcmp.gt.f32.partialorder %v815, 0.0
        %v819 = vsel %vm817, %v811, 1.0
        %v820 = vsel %vm818, %v815, 1.0
        %v821 = vrcp.pop %v819
        %v822 = vrcp.pop %v820
        %v823 = vmul.f32 %v809, %v821
        %v824 = vmul.f32 %v813, %v822
        %v825 = vsel %vm817, %v823, 0.0
        %v826 = vsel %vm818, %v824, 0.0
        %v827 = vadd.f32 %v825, %v740
        %v828 = vadd.f32 %v826, %v741
        %v829 = vpack.c.bf16 %v828, %v827
        %v830 = vld [vmem:[%s495] sm:$0xf]
        %v831 = vld [vmem:[%s495 + $0x4] sm:$0xf]
        %v832 = vld [vmem:[%s495 + $0x8] sm:$0xf]
        %v833 = vld [vmem:[%s495 + $0xc] sm:$0xf]
        %v834 = vld [vmem:[%s495 + $0x10] sm:$0xf]
        %v835 = vld [vmem:[%s495 + $0x14] sm:$0xf]
        %v836 = vld [vmem:[%s495 + $0x18] sm:$0xf]
        %v837 = vld [vmem:[%s495 + $0x1c] sm:$0xf]
        %v838 = vld [vmem:[%s495 + $0x20] sm:$0xf]
        %v839 = vld [vmem:[%s495 + $0x24] sm:$0xf]
        %v840 = vld [vmem:[%s495 + $0x28] sm:$0xf]
        %v841 = vld [vmem:[%s495 + $0x2c] sm:$0xf]
        %v842 = vld [vmem:[%s495 + $0x30] sm:$0xf]
        %v843 = vld [vmem:[%s495 + $0x34] sm:$0xf]
        %v844 = vld [vmem:[%s495 + $0x38] sm:$0xf]
        %v845 = vld [vmem:[%s495 + $0x3c] sm:$0xf]
        %v862 = vunpack.c.l.b16 %v830
        %v863 = vunpack.c.l.b16 %v831
        %v864 = vunpack.c.l.b16 %v832
        %v865 = vunpack.c.l.b16 %v833
        %v866 = vunpack.c.l.b16 %v834
        %v867 = vunpack.c.l.b16 %v835
        %v868 = vunpack.c.l.b16 %v836
        %v869 = vunpack.c.l.b16 %v837
        %v870 = vunpack.c.l.b16 %v838
        %v871 = vunpack.c.l.b16 %v839
        %v872 = vunpack.c.l.b16 %v840
        %v873 = vunpack.c.l.b16 %v841
        %v874 = vunpack.c.l.b16 %v842
        %v875 = vunpack.c.l.b16 %v843
        %v876 = vunpack.c.l.b16 %v844
        %v877 = vunpack.c.l.b16 %v845
        %v878 = vpack.c.b16 %v863, %v862
        %v879 = vpack.c.b16 %v865, %v864
        %v880 = vpack.c.b16 %v867, %v866
        %v881 = vpack.c.b16 %v869, %v868
        %v882 = vpack.c.b16 %v871, %v870
        %v883 = vpack.c.b16 %v873, %v872
        %v884 = vpack.c.b16 %v875, %v874
        %v885 = vpack.c.b16 %v877, %v876
        %894 = vmatprep.subr.bf16.mxu0 0
        %895 = vmatpush1.bf16.msra.mxu0 %v878
        %896 = vmatprep.subr.bf16.mxu0 0
        %897 = vmatpush1.bf16.msra.mxu0 %v879
        %898 = vmatprep.subr.bf16.mxu0 0
        %899 = vmatpush1.bf16.msra.mxu0 %v880
        %900 = vmatprep.subr.bf16.mxu0 0
        %901 = vmatpush1.bf16.msra.mxu0 %v881
        %902 = vmatprep.subr.bf16.mxu0 0
        %903 = vmatpush1.bf16.msra.mxu0 %v882
        %904 = vmatprep.subr.bf16.mxu0 0
        %905 = vmatpush1.bf16.msra.mxu0 %v883
        %906 = vmatprep.subr.bf16.mxu0 0
        %907 = vmatpush1.bf16.msra.mxu0 %v884
        %908 = vmatprep.subr.bf16.mxu0 0
        %909 = vmatpush1.bf16.msra.mxu0 %v885
        %910 = vmatprep.subr.bf16.mxu0 0
        %911 = vmatpush1.bf16.msra.mxu0 0
        %912 = vmatprep.subr.bf16.mxu0 0
        %913 = vmatpush1.bf16.msra.mxu0 0
        %914 = vmatprep.subr.bf16.mxu0 0
        %915 = vmatpush1.bf16.msra.mxu0 0
        %916 = vmatprep.subr.bf16.mxu0 0
        %917 = vmatpush1.bf16.msra.mxu0 0
        %918 = vmatprep.subr.bf16.mxu0 0
        %919 = vmatpush1.bf16.msra.mxu0 0
        %920 = vmatprep.subr.bf16.mxu0 0
        %921 = vmatpush1.bf16.msra.mxu0 0
        %922 = vmatprep.subr.bf16.mxu0 0
        %923 = vmatpush1.bf16.msra.mxu0 0
        %924 = vmatprep.subr.bf16.mxu0 0
        %925 = vmatpush1.bf16.msra.mxu0 0
        %926 = vmatprep.mubr.bf16.mxu0 0
        %927 = vmatmul.mubr.bf16.gmra.mrb[0].mxu0 %v829
        %v928 = vpop.f32.mrb[0].mxu0
        %v929 = vadd.f32 0.0, %v928
        %v930 = vpop.f32.mrb[0].mxu0
        %v931 = vpop.f32.mrb[0].mxu0
        %v932 = vadd.f32 0.0, %v931
        %v933 = vpop.f32.mrb[0].mxu0
        %934 = vdwg.mxu0
        %v935 = vld [vmem:[%s565] sm:$0x1]
        %v937 = vlaneseq
        %v938 = vshrl.u32 %v937, 7
        %v939 = vsub.s32 0, %v938
        %v940 = vrot.slane %v935, %v939
        %v942 = vmul.f32 %v929, %v940
        %v943 = vmul.f32 %v932, %v940
        %v944 = vld [vmem:[%s568] sm:$0x1]
        %v946 = vlaneseq
        %v947 = vshrl.u32 %v946, 7
        %v948 = vsub.s32 0, %v947
        %v949 = vrot.slane %v944, %v948
        %v951 = vadd.f32 %v942, %v949
        %v952 = vadd.f32 %v943, %v949
        %v953 = vmax.f32 %v951, 0.0
        %v954 = vmax.f32 %v952, 0.0
        %v955 = vpack.c.bf16 %v954, %v953
        %v956 = vld [vmem:[%s504] sm:$0xf]
        %v957 = vld [vmem:[%s504 + $0x4] sm:$0xf]
        %v958 = vld [vmem:[%s504 + $0x8] sm:$0xf]
        %v959 = vld [vmem:[%s504 + $0xc] sm:$0xf]
        %v960 = vld [vmem:[%s504 + $0x10] sm:$0xf]
        %v961 = vld [vmem:[%s504 + $0x14] sm:$0xf]
        %v962 = vld [vmem:[%s504 + $0x18] sm:$0xf]
        %v963 = vld [vmem:[%s504 + $0x1c] sm:$0xf]
        %v964 = vld [vmem:[%s504 + $0x20] sm:$0xf]
        %v965 = vld [vmem:[%s504 + $0x24] sm:$0xf]
        %v966 = vld [vmem:[%s504 + $0x28] sm:$0xf]
        %v967 = vld [vmem:[%s504 + $0x2c] sm:$0xf]
        %v968 = vld [vmem:[%s504 + $0x30] sm:$0xf]
        %v969 = vld [vmem:[%s504 + $0x34] sm:$0xf]
        %v970 = vld [vmem:[%s504 + $0x38] sm:$0xf]
        %v971 = vld [vmem:[%s504 + $0x3c] sm:$0xf]
        %v988 = vunpack.c.l.b16 %v956
        %v989 = vunpack.c.l.b16 %v957
        %v990 = vunpack.c.l.b16 %v958
        %v991 = vunpack.c.l.b16 %v959
        %v992 = vunpack.c.l.b16 %v960
        %v993 = vunpack.c.l.b16 %v961
        %v994 = vunpack.c.l.b16 %v962
        %v995 = vunpack.c.l.b16 %v963
        %v996 = vunpack.c.l.b16 %v964
        %v997 = vunpack.c.l.b16 %v965
        %v998 = vunpack.c.l.b16 %v966
        %v999 = vunpack.c.l.b16 %v967
        %v1000 = vunpack.c.l.b16 %v968
        %v1001 = vunpack.c.l.b16 %v969
        %v1002 = vunpack.c.l.b16 %v970
        %v1003 = vunpack.c.l.b16 %v971
        %v1004 = vpack.c.b16 %v989, %v988
        %v1005 = vpack.c.b16 %v991, %v990
        %v1006 = vpack.c.b16 %v993, %v992
        %v1007 = vpack.c.b16 %v995, %v994
        %v1008 = vpack.c.b16 %v997, %v996
        %v1009 = vpack.c.b16 %v999, %v998
        %v1010 = vpack.c.b16 %v1001, %v1000
        %v1011 = vpack.c.b16 %v1003, %v1002
        %1020 = vmatprep.subr.bf16.mxu0 0
        %1021 = vmatpush1.bf16.msra.mxu0 %v1004
        %1022 = vmatprep.subr.bf16.mxu0 0
        %1023 = vmatpush1.bf16.msra.mxu0 %v1005
        %1024 = vmatprep.subr.bf16.mxu0 0
        %1025 = vmatpush1.bf16.msra.mxu0 %v1006
        %1026 = vmatprep.subr.bf16.mxu0 0
        %1027 = vmatpush1.bf16.msra.mxu0 %v1007
        %1028 = vmatprep.subr.bf16.mxu0 0
        %1029 = vmatpush1.bf16.msra.mxu0 %v1008
        %1030 = vmatprep.subr.bf16.mxu0 0
        %1031 = vmatpush1.bf16.msra.mxu0 %v1009
        %1032 = vmatprep.subr.bf16.mxu0 0
        %1033 = vmatpush1.bf16.msra.mxu0 %v1010
        %1034 = vmatprep.subr.bf16.mxu0 0
        %1035 = vmatpush1.bf16.msra.mxu0 %v1011
        %1036 = vmatprep.subr.bf16.mxu0 0
        %1037 = vmatpush1.bf16.msra.mxu0 0
        %1038 = vmatprep.subr.bf16.mxu0 0
        %1039 = vmatpush1.bf16.msra.mxu0 0
        %1040 = vmatprep.subr.bf16.mxu0 0
        %1041 = vmatpush1.bf16.msra.mxu0 0
        %1042 = vmatprep.subr.bf16.mxu0 0
        %1043 = vmatpush1.bf16.msra.mxu0 0
        %1044 = vmatprep.subr.bf16.mxu0 0
        %1045 = vmatpush1.bf16.msra.mxu0 0
        %1046 = vmatprep.subr.bf16.mxu0 0
        %1047 = vmatpush1.bf16.msra.mxu0 0
        %1048 = vmatprep.subr.bf16.mxu0 0
        %1049 = vmatpush1.bf16.msra.mxu0 0
        %1050 = vmatprep.subr.bf16.mxu0 0
        %1051 = vmatpush1.bf16.msra.mxu0 0
        %1052 = vmatprep.mubr.bf16.mxu0 0
        %1053 = vmatmul.mubr.bf16.gmra.mrb[0].mxu0 %v955
        %v1054 = vpop.f32.mrb[0].mxu0
        %v1055 = vadd.f32 0.0, %v1054
        %v1056 = vpop.f32.mrb[0].mxu0
        %v1057 = vpop.f32.mrb[0].mxu0
        %v1058 = vadd.f32 0.0, %v1057
        %v1059 = vpop.f32.mrb[0].mxu0
        %1060 = vdwg.mxu0
        %v1061 = vadd.f32 %v691, %v1055
        %v1062 = vadd.f32 %v692, %v1058
        %1063 = vst [vmem:[#allocation2] sm:$0xff] %v1061
        %1064 = vst [vmem:[#allocation2 + $0x8] sm:$0xff] %v1062
        %p1065 = scmp.eq.s32.totalorder %s27, 1
        // Predicated region
        $region97: #{tpu_custom_call.1} parent=67 // pred_check
          %p1066 = pneg %p1065
        $region98: #{tpu_custom_call.1} parent=67 // pred_check_branch
          %1068 = sbr.rel (%p1066) target = $region100
        $region99: #{tpu_custom_call.1} parent=67 // pred_region
          %v1069 = vld [vmem:[#allocation2] sm:$0xff]
          %v1070 = vld [vmem:[#allocation2 + $0x8] sm:$0xff]
          %v1071 = vpack.c.bf16 %v1070, %v1069
          %v1072 = vld [vmem:[#allocation9] sm:$0xf]
          %v1073 = vld [vmem:[#allocation9 + $0x4] sm:$0xf]
          %v1074 = vld [vmem:[#allocation9 + $0x8] sm:$0xf]
          %v1075 = vld [vmem:[#allocation9 + $0xc] sm:$0xf]
          %v1076 = vld [vmem:[#allocation9 + $0x10] sm:$0xf]
          %v1077 = vld [vmem:[#allocation9 + $0x14] sm:$0xf]
          %v1078 = vld [vmem:[#allocation9 + $0x18] sm:$0xf]
          %v1079 = vld [vmem:[#allocation9 + $0x1c] sm:$0xf]
          %v1080 = vld [vmem:[#allocation9 + $0x20] sm:$0xf]
          %v1081 = vld [vmem:[#allocation9 + $0x24] sm:$0xf]
          %v1082 = vld [vmem:[#allocation9 + $0x28] sm:$0xf]
          %v1083 = vld [vmem:[#allocation9 + $0x2c] sm:$0xf]
          %v1084 = vld [vmem:[#allocation9 + $0x30] sm:$0xf]
          %v1085 = vld [vmem:[#allocation9 + $0x34] sm:$0xf]
          %v1086 = vld [vmem:[#allocation9 + $0x38] sm:$0xf]
          %v1087 = vld [vmem:[#allocation9 + $0x3c] sm:$0xf]
          %v1088 = vld [vmem:[%s5] sm:$0x1]
          %v1090 = vlaneseq
          %v1091 = vshrl.u32 %v1090, 7
          %v1092 = vsub.s32 0, %v1091
          %v1093 = vrot.slane %v1088, %v1092
          %v1111 = vunpack.c.l.b16 %v1072
          %v1112 = vunpack.c.l.b16 %v1073
          %v1113 = vunpack.c.l.b16 %v1074
          %v1114 = vunpack.c.l.b16 %v1075
          %v1115 = vunpack.c.l.b16 %v1076
          %v1116 = vunpack.c.l.b16 %v1077
          %v1117 = vunpack.c.l.b16 %v1078
          %v1118 = vunpack.c.l.b16 %v1079
          %v1119 = vunpack.c.l.b16 %v1080
          %v1120 = vunpack.c.l.b16 %v1081
          %v1121 = vunpack.c.l.b16 %v1082
          %v1122 = vunpack.c.l.b16 %v1083
          %v1123 = vunpack.c.l.b16 %v1084
          %v1124 = vunpack.c.l.b16 %v1085
          %v1125 = vunpack.c.l.b16 %v1086
          %v1126 = vunpack.c.l.b16 %v1087
          %v1127 = vpack.c.b16 %v1112, %v1111
          %v1128 = vpack.c.b16 %v1114, %v1113
          %v1129 = vpack.c.b16 %v1116, %v1115
          %v1130 = vpack.c.b16 %v1118, %v1117
          %v1131 = vpack.c.b16 %v1120, %v1119
          %v1132 = vpack.c.b16 %v1122, %v1121
          %v1133 = vpack.c.b16 %v1124, %v1123
          %v1134 = vpack.c.b16 %v1126, %v1125
          %1143 = vmatprep.subr.bf16.mxu0 0
          %1144 = vmatpush1.bf16.msra.mxu0 %v1127
          %1145 = vmatprep.subr.bf16.mxu0 0
          %1146 = vmatpush1.bf16.msra.mxu0 %v1128
          %1147 = vmatprep.subr.bf16.mxu0 0
          %1148 = vmatpush1.bf16.msra.mxu0 %v1129
          %1149 = vmatprep.subr.bf16.mxu0 0
          %1150 = vmatpush1.bf16.msra.mxu0 %v1130
          %1151 = vmatprep.subr.bf16.mxu0 0
          %1152 = vmatpush1.bf16.msra.mxu0 %v1131
          %1153 = vmatprep.subr.bf16.mxu0 0
          %1154 = vmatpush1.bf16.msra.mxu0 %v1132
          %1155 = vmatprep.subr.bf16.mxu0 0
          %1156 = vmatpush1.bf16.msra.mxu0 %v1133
          %1157 = vmatprep.subr.bf16.mxu0 0
          %1158 = vmatpush1.bf16.msra.mxu0 %v1134
          %1159 = vmatprep.subr.bf16.mxu0 0
          %1160 = vmatpush1.bf16.msra.mxu0 0
          %1161 = vmatprep.subr.bf16.mxu0 0
          %1162 = vmatpush1.bf16.msra.mxu0 0
          %1163 = vmatprep.subr.bf16.mxu0 0
          %1164 = vmatpush1.bf16.msra.mxu0 0
          %1165 = vmatprep.subr.bf16.mxu0 0
          %1166 = vmatpush1.bf16.msra.mxu0 0
          %1167 = vmatprep.subr.bf16.mxu0 0
          %1168 = vmatpush1.bf16.msra.mxu0 0
          %1169 = vmatprep.subr.bf16.mxu0 0
          %1170 = vmatpush1.bf16.msra.mxu0 0
          %1171 = vmatprep.subr.bf16.mxu0 0
          %1172 = vmatpush1.bf16.msra.mxu0 0
          %1173 = vmatprep.subr.bf16.mxu0 0
          %1174 = vmatpush1.bf16.msra.mxu0 0
          %1175 = vmatprep.mubr.bf16.mxu0 0
          %1176 = vmatmul.mubr.bf16.gmra.mrb[0].mxu0 %v1071
          %v1177 = vpop.f32.mrb[0].mxu0
          %v1178 = vadd.f32 %v1093, %v1177
          %v1179 = vpop.f32.mrb[0].mxu0
          %v1180 = vpop.f32.mrb[0].mxu0
          %v1181 = vadd.f32 %v1093, %v1180
          %v1182 = vpop.f32.mrb[0].mxu0
          %1183 = vdwg.mxu0
          %1184 = vst [vmem:[#allocation13] sm:$0xff] %v1178
          %1185 = vst [vmem:[#allocation13 + $0x8] sm:$0xff] %v1181
        $region100: #{tpu_custom_call.1} parent=67 // pred_fallthru
          _
        // Predicated region
        $region101: #{tpu_custom_call.1} parent=67 // pred_check
          %p1186 = pneg %p322
        $region102: #{tpu_custom_call.1} parent=67 // pred_check_branch
          %1188 = sbr.rel (%p1186) target = $region104
        $region103: #{tpu_custom_call.1} parent=67 // pred_region
          %s1190 = ssub.s32 256, 256
          %1191 = vsyncadd [#allocation5], %s1190
          %s1192 = sshll.u32 [#allocation13], 4
          %s1193 = int_to_ptr.vmem [resolvable:$true] %s1192
          %1198 = dma.vmem_to_hbm [thread:$0]  %s1193, 256, %s12, [#allocation5], 128, 128, 8
        $region104: #{tpu_custom_call.1} parent=67 // pred_fallthru
          _
        // Predicated region
        $region105: #{tpu_custom_call.1} parent=67 // pred_check
          %p1199 = pneg %p322
        $region106: #{tpu_custom_call.1} parent=67 // pred_check_branch
          %1201 = sbr.rel (%p1199) target = $region108
        $region107: #{tpu_custom_call.1} parent=67 // pred_region
          %1202 = dma.done [#allocation5], 256
        $region108: #{tpu_custom_call.1} parent=67 // pred_fallthru
          _
      $region68: #{tpu_custom_call.1} parent=5 // pred_fallthru
        _
      %p1203 = scmp.le.s32.totalorder 2, %s22
      // Predicated region
      $region109: #{tpu_custom_call.1} parent=5 // pred_check
        %p1204 = pneg %p1203
      $region110: #{tpu_custom_call.1} parent=5 // pred_check_branch
        %1206 = sbr.rel (%p1204) target = $region112
      $region111: #{tpu_custom_call.1} parent=5 // pred_region
        %s1207 = ssub.s32 %s22, 2
      $region112: #{tpu_custom_call.1} parent=5 // pred_fallthru
        _
    $region6: #{tpu_custom_call.1} parent=1 // loop_footer
      %s26 = sadd.s32 1, %s22
    $region7: #{tpu_custom_call.1} parent=1 // loop_footer_branch
      %21 = sbr.rel target = $region3
    $region8: #{tpu_custom_call.1} parent=1 // loop_exit
      _
    %1208 = vsyncpa [#allocation4], 1
    %s1209 = scalar_lea.sflag [#allocation4], 1
    %1210 = vsyncpa %s1209, 1
    %1211 = vsyncpa [#allocation7], 1
    %1212 = vsyncpa [#allocation10], 1
    %1213 = vsyncpa [#allocation5], 1
    %s1214 = scalar_lea.sflag [#allocation5], 1
    %1215 = vsyncpa %s1214, 1

</llo_original>
